<compile_context>
chip_gen: v6e
topology: v6e:2x2x1
jax: 0.10.0
libtpu: 0.0.40
codegen_flags: <defaults>
</compile_context>

<pallas_src>
import math

import jax
import jax.numpy as jnp
from jax import lax
from jax.experimental import pallas as pl
from jax.experimental.pallas import tpu as pltpu

NUM_CLASSES = 2                  # pred is (B, 2, H, W) per the pixel_acc docstring
IGNORE_LABEL = 255               # config.TRAIN.IGNORE_LABEL
BALANCE_WEIGHTS = (0.4, 1.0)     # sem_loss weights over [x_extra_p, x_output]
SB_WEIGHT = 1.0                  # sem_loss weight for the single-score call
HIDDEN = 32
NUM_HEAD_ROWS = 2 * NUM_CLASSES + 1          # P(2) + main(2) + D(1) = 5
SIGMOID_08_LOGIT = float(math.log(0.8 / 0.2))  # sigmoid(z) > 0.8  <=>  z > log(4)
MAX_TILE = 32768                 # rows per grid step (amortizes ~0.35us/step overhead)
VMEM_LIMIT_BYTES = 40 * 1024 * 1024  # padding-aware budget; < v7x physical 64 MiB

# lanes of the packed scalar accumulator output
# 0 ce_p_sum, 1 ce_p_cnt, 2 ce_o_sum, 3 ce_o_cnt, 4 acc_sum, 5 pix_sum,
# 6 bce_sum, 7 ce_sb_sum, 8 ce_sb_cnt
_NUM_SCALARS = 9


# ----------------------------------------------------------------------------
# Fused model + loss kernel (channel-major layout, 2-class specialized).
# ----------------------------------------------------------------------------
def _make_kernel(tile, hw_real, hw_pad):
    need_mask = (hw_pad != hw_real)

    def kernel(x_ref, w1_ref, b1_ref, wh_ref, bh_ref, lbl_ref, bd_ref,
               p_ref, o_ref, scal_ref):
        # -------- init this batch-row's resident scalar accumulator
        @pl.when(pl.program_id(1) == 0)
        def _():
            scal_ref[...] = jnp.zeros_like(scal_ref)

        # -------- model: 1x1 convs as (Cout, Cin) @ (Cin, tile), lane-dense
        x = x_ref[0]                                                  # (Cin, tile)
        h = jnp.dot(w1_ref[...], x, preferred_element_type=jnp.float32) + b1_ref[...]
        h = jnp.maximum(h, 0.0)                                       # (HIDDEN, tile)
        heads = jnp.dot(wh_ref[...], h,
                        preferred_element_type=jnp.float32) + bh_ref[...]  # (5, tile)
        p = heads[0:NUM_CLASSES]                                      # (2, tile)
        o = heads[NUM_CLASSES:2 * NUM_CLASSES]                        # (2, tile)
        z = heads[2 * NUM_CLASSES:]                                   # (1, tile) d-head
        # TODO(synk): keep logits f32; bf16 stores would halve output HBM bytes
        # on v5e but change the returned dtype vs. the PyTorch reference.
        p_ref[0] = p
        o_ref[0] = o

        lbl = lbl_ref[0]                                              # (1, tile) int32
        bd = bd_ref[0]                                                # (1, tile) f32

        if need_mask:
            pos = (pl.program_id(1) * tile
                   + lax.broadcasted_iota(jnp.int32, (1, tile), 1))
            pix_valid = (pos < hw_real).astype(jnp.float32)           # tail mask
        else:
            pix_valid = None

        # -------- 2-class specialized logsumexp / cross-entropy
        p0, p1 = p[0:1], p[1:2]
        o0, o1 = o[0:1], o[1:2]

        def lse2(a, b):                    # logsumexp of two rows (1 exp + 1 log1p)
            return jnp.maximum(a, b) + jnp.log1p(jnp.exp(-jnp.abs(a - b)))

        def masked_ce_sums(c0, c1, lse, labels):
            # CE with ignore_index=IGNORE_LABEL; returns (sum, count) as (1,1)
            picked = jnp.where(labels == 1, c1, c0)
            valid = jnp.logical_and(labels != IGNORE_LABEL,
                                    labels >= 0).astype(jnp.float32)
            ce = (lse - picked) * valid
            return (jnp.sum(ce, axis=1, keepdims=True),
                    jnp.sum(valid, axis=1, keepdims=True))

        lse_p = lse2(p0, p1)
        lse_o = lse2(o0, o1)                       # shared by both CE calls on `o`
        ce_p_sum, ce_p_cnt = masked_ce_sums(p0, p1, lse_p, lbl)
        ce_o_sum, ce_o_cnt = masked_ce_sums(o0, o1, lse_o, lbl)

        # pixel_acc on the P head (reference: pixel_acc(pred=x_extra_p, label=labels))
        preds = (p1 > p0).astype(jnp.int32)        # argmax over 2 classes (ties -> 0)
        valid_acc = (lbl >= 0).astype(jnp.float32)  # 255 counts as valid, like torch ref
        if pix_valid is not None:
            valid_acc = valid_acc * pix_valid
        correct = (preds == lbl).astype(jnp.float32)
        acc_sum = jnp.sum(valid_acc * correct, axis=1, keepdims=True)
        pix_sum = jnp.sum(valid_acc, axis=1, keepdims=True)

        # boundary loss: BCE-with-logits (numerically stable), summed here
        bce = jnp.maximum(z, 0.0) - z * bd + jnp.log1p(jnp.exp(-jnp.abs(z)))
        if pix_valid is not None:
            bce = bce * pix_valid
        bce_sum = jnp.sum(bce, axis=1, keepdims=True)

        # bd_label = where(sigmoid(d) > 0.8, labels, IGNORE) — logit-space threshold
        bd_label = jnp.where(z > SIGMOID_08_LOGIT, lbl, jnp.int32(IGNORE_LABEL))
        ce_sb_sum, ce_sb_cnt = masked_ce_sums(o0, o1, lse_o, bd_label)

        # -------- pack the 9 partial sums into one lane-dense block and accumulate
        vals = (ce_p_sum, ce_p_cnt, ce_o_sum, ce_o_cnt,
                acc_sum, pix_sum, bce_sum, ce_sb_sum, ce_sb_cnt)
        lane = lax.broadcasted_iota(jnp.int32, scal_ref.shape, 2)
        row = jnp.zeros(scal_ref.shape, jnp.float32)
        for idx, v in enumerate(vals):
            row = row + jnp.where(lane == idx, v, 0.0)   # v (1,1) broadcasts
        scal_ref[...] += row

    return kernel


def _choose_tile(hw, max_tile=MAX_TILE):
    """Lane-dense tile and padded pixel count (always tiled; waste < n_tiles*128)."""
    hw128 = ((hw + 127) // 128) * 128
    ntiles = -(-hw128 // max_tile)          # ceil
    tile = -(-hw128 // ntiles)              # ceil
    tile = ((tile + 127) // 128) * 128
    return tile, tile * ntiles


def _fused_call(x, lbl, bd, params, tile, hw_real, hw_pad):
    b, cin, _ = x.shape
    grid = (b, hw_pad // tile)
    kernel = _make_kernel(tile, hw_real, hw_pad)

    chan_map = lambda i, j: (i, 0, j)
    full2 = lambda arr: pl.BlockSpec(arr.shape, lambda i, j: (0, 0))

    in_specs = [
        pl.BlockSpec((1, cin, tile), chan_map),
        full2(params["w1"]), full2(params["b1"]),
        full2(params["wh"]), full2(params["bh"]),
        pl.BlockSpec((1, 1, tile), chan_map),
        pl.BlockSpec((1, 1, tile), chan_map),
    ]
    out_specs = (
        pl.BlockSpec((1, NUM_CLASSES, tile), chan_map),
        pl.BlockSpec((1, NUM_CLASSES, tile), chan_map),
        # per-batch resident scalar accumulator (keeps batch axis parallel)
        pl.BlockSpec((1, 8, 128), lambda i, j: (i, 0, 0)),
    )
    out_shape = (
        jax.ShapeDtypeStruct((b, NUM_CLASSES, hw_pad), jnp.float32),
        jax.ShapeDtypeStruct((b, NUM_CLASSES, hw_pad), jnp.float32),
        jax.ShapeDtypeStruct((b, 8, 128), jnp.float32),
    )
    return pl.pallas_call(
        kernel,
        grid=grid,
        in_specs=in_specs,
        out_specs=out_specs,
        out_shape=out_shape,
        compiler_params=pltpu.CompilerParams(
            # batch axis is truly independent now -> megacore sharding on v7x;
            # pixel axis carries the per-batch scalar accumulator -> arbitrary.
            dimension_semantics=("parallel", "arbitrary"),
            vmem_limit_bytes=VMEM_LIMIT_BYTES),
    )(x, params["w1"], params["b1"], params["wh"], params["bh"], lbl, bd)


# ----------------------------------------------------------------------------
# FullModel.forward
# ----------------------------------------------------------------------------
def full_model_forward(params, inputs, labels, bd_gt):
    """inputs: (B,3,H,W) f32 NCHW, labels: (B,H,W) int {0,255}, bd_gt: (B,H,W) {0,1}."""
    b, cin, h, w = inputs.shape
    hw = h * w
    n = b * hw

    # NCHW is already the channel-major compute layout -> plain reshapes, no transposes.
    x = inputs.reshape(b, cin, hw).astype(jnp.float32)
    lbl = labels.reshape(b, 1, hw).astype(jnp.int32)
    bd = bd_gt.reshape(b, 1, hw).astype(jnp.float32)

    tile, hw_pad = _choose_tile(hw)
    if hw_pad != hw:
        pad = hw_pad - hw
        x = jnp.pad(x, ((0, 0), (0, 0), (0, pad)))
        lbl = jnp.pad(lbl, ((0, 0), (0, 0), (0, pad)),
                      constant_values=IGNORE_LABEL)      # padded pixels ignored in CE
        bd = jnp.pad(bd, ((0, 0), (0, 0), (0, pad)))

    # TODO(synk): bilinear F.interpolate branch (ph != h) not implemented; the
    # stand-in heads already output at label resolution so it is never taken.
    p_flat, o_flat, scal = _fused_call(x, lbl, bd, params, tile, hw, hw_pad)

    scal_tot = jnp.sum(scal[:, 0, :], axis=0)            # sum per-batch rows -> (128,)
    s = lambda i: scal_tot[i]
    safe_mean = lambda t, c: jnp.where(c > 0, t / jnp.maximum(c, 1.0), 0.0)

    # sem_loss over [x_extra_p, x_output] with balance weights
    ce_p_mean = safe_mean(s(0), s(1))
    ce_o_mean = safe_mean(s(2), s(3))
    loss_s = BALANCE_WEIGHTS[0] * ce_p_mean + BALANCE_WEIGHTS[1] * ce_o_mean
    # boundary loss: BCE-with-logits, mean over all (real) pixels
    loss_b = s(6) / jnp.float32(n)
    # sigmoid-gated bd_label CE on x_output
    loss_sb = SB_WEIGHT * safe_mean(s(7), s(8))

    loss = jnp.reshape(loss_s + loss_b + loss_sb, (1,))   # torch.unsqueeze(..., 0)
    acc = s(4) / (s(5) + 1e-10)

    # network_outputs[:-1] back in PyTorch NCHW layout (drop tail padding, reshape)
    p_nchw = p_flat[:, :, :hw].reshape(b, NUM_CLASSES, h, w)
    o_nchw = o_flat[:, :, :hw].reshape(b, NUM_CLASSES, h, w)

    return loss, [p_nchw, o_nchw], acc, [loss_s, loss_b]


def init_params(key, cin=3, hidden=HIDDEN, num_classes=NUM_CLASSES):
    ks = jax.random.split(key, 4)
    s = 0.1
    return {
        "w1": s * jax.random.normal(ks[0], (hidden, cin), jnp.float32),
        "b1": s * jax.random.normal(ks[1], (hidden, 1), jnp.float32),
        # rows 0:2 -> P head, 2:4 -> main head, 4 -> D head (concatenated)
        "wh": s * jax.random.normal(ks[2], (2 * num_classes + 1, hidden), jnp.float32),
        "bh": s * jax.random.normal(ks[3], (2 * num_classes + 1, 1), jnp.float32),
    }


if __name__ == "__main__":
    key = jax.random.PRNGKey(0)
    k_param, k_in, k_lbl, k_bd = jax.random.split(key, 4)

    B, CIN, H, W = 2, 3, 16, 16
    params = init_params(k_param, cin=CIN)

    inputs = jax.random.normal(k_in, (B, CIN, H, W), jnp.float32)
    labels = jnp.where(jax.random.uniform(k_lbl, (B, H, W)) > 0.5,
                       jnp.int32(IGNORE_LABEL), jnp.int32(0))
    bd_gt = jax.random.bernoulli(k_bd, 0.3, (B, H, W)).astype(jnp.float32)

    fwd = jax.jit(full_model_forward)
    loss, outputs, acc, (loss_s, loss_b) = fwd(params, inputs, labels, bd_gt)
    jax.block_until_ready((loss, outputs, acc, loss_s, loss_b))

    assert loss.shape == (1,)
    assert outputs[0].shape == (B, NUM_CLASSES, H, W)
    assert outputs[1].shape == (B, NUM_CLASSES, H, W)
    assert bool(jnp.isfinite(loss).all()) and bool(jnp.isfinite(acc))
    print("KERNEL_OK")
</pallas_src>

<mosaic_0001>
module attributes {stable_mosaic.version = 11 : i64} {
  func.func @kernel(%arg0: i32, %arg1: i32, %arg2: memref<1x3x256xf32, #tpu.memory_space<vmem>>, %arg3: memref<32x3xf32, #tpu.memory_space<vmem>>, %arg4: memref<32x1xf32, #tpu.memory_space<vmem>>, %arg5: memref<5x32xf32, #tpu.memory_space<vmem>>, %arg6: memref<5x1xf32, #tpu.memory_space<vmem>>, %arg7: memref<1x1x256xi32, #tpu.memory_space<vmem>>, %arg8: memref<1x1x256xf32, #tpu.memory_space<vmem>>, %arg9: memref<1x2x256xf32, #tpu.memory_space<vmem>>, %arg10: memref<1x2x256xf32, #tpu.memory_space<vmem>>, %arg11: memref<1x8x128xf32, #tpu.memory_space<vmem>>) attributes {dimension_semantics = [#tpu.dimension_semantics<parallel>, #tpu.dimension_semantics<arbitrary>], iteration_bounds = array<i64: 2, 1>, scalar_prefetch = 0 : i64, scratch_operands = 0 : i64, tpu.core_type = #tpu.core_type<tc>, window_params = [{transform_indices = @transform_0, window_bounds = array<i64: 1, 3, 256>}, {pipeline_mode = #tpu.pipeline_mode<synchronous>, transform_indices = @transform_1, window_bounds = array<i64: 32, 3>}, {pipeline_mode = #tpu.pipeline_mode<synchronous>, transform_indices = @transform_2, window_bounds = array<i64: 32, 1>}, {pipeline_mode = #tpu.pipeline_mode<synchronous>, transform_indices = @transform_3, window_bounds = array<i64: 5, 32>}, {pipeline_mode = #tpu.pipeline_mode<synchronous>, transform_indices = @transform_4, window_bounds = array<i64: 5, 1>}, {transform_indices = @transform_5, window_bounds = array<i64: 1, 1, 256>}, {transform_indices = @transform_6, window_bounds = array<i64: 1, 1, 256>}, {transform_indices = @transform_7, window_bounds = array<i64: 1, 2, 256>}, {transform_indices = @transform_8, window_bounds = array<i64: 1, 2, 256>}, {transform_indices = @transform_9, window_bounds = array<i64: 1, 8, 128>}]} {
    %c0_i32 = arith.constant 0 : i32
    %0 = arith.cmpi eq, %arg1, %c0_i32 : i32
    %1 = arith.extui %0 : i1 to i32
    %c0_i32_0 = arith.constant 0 : i32
    %2 = arith.cmpi ne, %1, %c0_i32_0 : i32
    scf.if %2 {
      %cst_66 = arith.constant 0.000000e+00 : f32
      %196 = vector.broadcast %cst_66 : f32 to vector<1x8x128xf32>
      %c0_67 = arith.constant 0 : index
      %c0_68 = arith.constant 0 : index
      %c0_69 = arith.constant 0 : index
      %197 = vector.load %arg11[%c0_67, %c0_68, %c0_69] : memref<1x8x128xf32, #tpu.memory_space<vmem>>, vector<1x8x128xf32>
      tpu.vector_store %arg11[%c0_67, %c0_68, %c0_69], %196 {strides = array<i32>} : memref<1x8x128xf32, #tpu.memory_space<vmem>>, vector<1x8x128xf32>,
    } else {
    }
    %c0 = arith.constant 0 : index
    %c0_1 = arith.constant 0 : index
    %c0_2 = arith.constant 0 : index
    %3 = vector.load %arg2[%c0, %c0_1, %c0_2] : memref<1x3x256xf32, #tpu.memory_space<vmem>>, vector<1x3x256xf32>
    %4 = vector.shape_cast %3 : vector<1x3x256xf32> to vector<3x256xf32>
    %c0_3 = arith.constant 0 : index
    %c0_4 = arith.constant 0 : index
    %5 = vector.load %arg3[%c0_3, %c0_4] : memref<32x3xf32, #tpu.memory_space<vmem>>, vector<32x3xf32>
    %cst = arith.constant dense<0.000000e+00> : vector<32x256xf32>
    %6 = tpu.matmul %5, %4, %cst {dimension_numbers = #tpu.dot_dimension_numbers<[1], [0], [0], [1], [0, 0, 1, 1], [], []>} : vector<32x3xf32>, vector<3x256xf32>, vector<32x256xf32> -> vector<32x256xf32>
    %c0_5 = arith.constant 0 : index
    %c0_6 = arith.constant 0 : index
    %7 = vector.load %arg4[%c0_5, %c0_6] : memref<32x1xf32, #tpu.memory_space<vmem>>, vector<32x1xf32>
    %8 = vector.broadcast %7 : vector<32x1xf32> to vector<32x256xf32>
    %9 = arith.addf %6, %8 : vector<32x256xf32>
    %cst_7 = arith.constant 0.000000e+00 : f32
    %10 = vector.broadcast %cst_7 : f32 to vector<32x256xf32>
    %11 = arith.maximumf %9, %10 : vector<32x256xf32>
    %c0_8 = arith.constant 0 : index
    %c0_9 = arith.constant 0 : index
    %12 = vector.load %arg5[%c0_8, %c0_9] : memref<5x32xf32, #tpu.memory_space<vmem>>, vector<5x32xf32>
    %cst_10 = arith.constant dense<0.000000e+00> : vector<5x256xf32>
    %13 = tpu.matmul %12, %11, %cst_10 {dimension_numbers = #tpu.dot_dimension_numbers<[1], [0], [0], [1], [0, 0, 1, 1], [], []>} : vector<5x32xf32>, vector<32x256xf32>, vector<5x256xf32> -> vector<5x256xf32>
    %c0_11 = arith.constant 0 : index
    %c0_12 = arith.constant 0 : index
    %14 = vector.load %arg6[%c0_11, %c0_12] : memref<5x1xf32, #tpu.memory_space<vmem>>, vector<5x1xf32>
    %15 = vector.broadcast %14 : vector<5x1xf32> to vector<5x256xf32>
    %16 = arith.addf %13, %15 : vector<5x256xf32>
    %17 = vector.extract_strided_slice %16 {offsets = [0, 0], sizes = [2, 256], strides = [1, 1]} : vector<5x256xf32> to vector<2x256xf32>
    %18 = vector.extract_strided_slice %16 {offsets = [2, 0], sizes = [2, 256], strides = [1, 1]} : vector<5x256xf32> to vector<2x256xf32>
    %19 = vector.extract_strided_slice %16 {offsets = [4, 0], sizes = [1, 256], strides = [1, 1]} : vector<5x256xf32> to vector<1x256xf32>
    %c0_13 = arith.constant 0 : index
    %c0_14 = arith.constant 0 : index
    %c0_15 = arith.constant 0 : index
    %20 = vector.load %arg9[%c0_13, %c0_14, %c0_15] : memref<1x2x256xf32, #tpu.memory_space<vmem>>, vector<1x2x256xf32>
    %21 = vector.shape_cast %20 : vector<1x2x256xf32> to vector<2x256xf32>
    %22 = vector.shape_cast %17 : vector<2x256xf32> to vector<1x2x256xf32>
    tpu.vector_store %arg9[%c0_13, %c0_14, %c0_15], %22 {strides = array<i32>} : memref<1x2x256xf32, #tpu.memory_space<vmem>>, vector<1x2x256xf32>,
    %c0_16 = arith.constant 0 : index
    %c0_17 = arith.constant 0 : index
    %c0_18 = arith.constant 0 : index
    %23 = vector.load %arg10[%c0_16, %c0_17, %c0_18] : memref<1x2x256xf32, #tpu.memory_space<vmem>>, vector<1x2x256xf32>
    %24 = vector.shape_cast %23 : vector<1x2x256xf32> to vector<2x256xf32>
    %25 = vector.shape_cast %18 : vector<2x256xf32> to vector<1x2x256xf32>
    tpu.vector_store %arg10[%c0_16, %c0_17, %c0_18], %25 {strides = array<i32>} : memref<1x2x256xf32, #tpu.memory_space<vmem>>, vector<1x2x256xf32>,
    %c0_19 = arith.constant 0 : index
    %c0_20 = arith.constant 0 : index
    %c0_21 = arith.constant 0 : index
    %26 = vector.load %arg7[%c0_19, %c0_20, %c0_21] : memref<1x1x256xi32, #tpu.memory_space<vmem>>, vector<1x1x256xi32>
    %27 = vector.shape_cast %26 : vector<1x1x256xi32> to vector<1x256xi32>
    %c0_22 = arith.constant 0 : index
    %c0_23 = arith.constant 0 : index
    %c0_24 = arith.constant 0 : index
    %28 = vector.load %arg8[%c0_22, %c0_23, %c0_24] : memref<1x1x256xf32, #tpu.memory_space<vmem>>, vector<1x1x256xf32>
    %29 = vector.shape_cast %28 : vector<1x1x256xf32> to vector<1x256xf32>
    %30 = vector.extract_strided_slice %17 {offsets = [0, 0], sizes = [1, 256], strides = [1, 1]} : vector<2x256xf32> to vector<1x256xf32>
    %31 = vector.extract_strided_slice %17 {offsets = [1, 0], sizes = [1, 256], strides = [1, 1]} : vector<2x256xf32> to vector<1x256xf32>
    %32 = vector.extract_strided_slice %18 {offsets = [0, 0], sizes = [1, 256], strides = [1, 1]} : vector<2x256xf32> to vector<1x256xf32>
    %33 = vector.extract_strided_slice %18 {offsets = [1, 0], sizes = [1, 256], strides = [1, 1]} : vector<2x256xf32> to vector<1x256xf32>
    %34 = arith.maximumf %30, %31 : vector<1x256xf32>
    %35 = arith.subf %30, %31 : vector<1x256xf32>
    %36 = math.absf %35 : vector<1x256xf32>
    %cst_25 = arith.constant 0.000000e+00 : f32
    %37 = vector.broadcast %cst_25 : f32 to vector<1x256xf32>
    %38 = arith.subf %37, %36 : vector<1x256xf32>
    %39 = math.exp %38 : vector<1x256xf32>
    %40 = math.log1p %39 : vector<1x256xf32>
    %41 = arith.addf %34, %40 : vector<1x256xf32>
    %42 = arith.maximumf %32, %33 : vector<1x256xf32>
    %43 = arith.subf %32, %33 : vector<1x256xf32>
    %44 = math.absf %43 : vector<1x256xf32>
    %cst_26 = arith.constant 0.000000e+00 : f32
    %45 = vector.broadcast %cst_26 : f32 to vector<1x256xf32>
    %46 = arith.subf %45, %44 : vector<1x256xf32>
    %47 = math.exp %46 : vector<1x256xf32>
    %48 = math.log1p %47 : vector<1x256xf32>
    %49 = arith.addf %42, %48 : vector<1x256xf32>
    %c1_i32 = arith.constant 1 : i32
    %50 = vector.broadcast %c1_i32 : i32 to vector<1x256xi32>
    %51 = arith.cmpi eq, %27, %50 : vector<1x256xi32>
    %52 = arith.select %51, %31, %30 : vector<1x256xi1>, vector<1x256xf32>
    %c255_i32 = arith.constant 255 : i32
    %53 = vector.broadcast %c255_i32 : i32 to vector<1x256xi32>
    %54 = arith.cmpi ne, %27, %53 : vector<1x256xi32>
    %c0_i32_27 = arith.constant 0 : i32
    %55 = vector.broadcast %c0_i32_27 : i32 to vector<1x256xi32>
    %56 = arith.cmpi sge, %27, %55 : vector<1x256xi32>
    %57 = arith.andi %54, %56 : vector<1x256xi1>
    %58 = arith.extui %57 : vector<1x256xi1> to vector<1x256xi32>
    %59 = arith.sitofp %58 : vector<1x256xi32> to vector<1x256xf32>
    %60 = arith.subf %41, %52 : vector<1x256xf32>
    %61 = arith.mulf %60, %59 : vector<1x256xf32>
    %cst_28 = arith.constant dense<0.000000e+00> : vector<1xf32>
    %62 = vector.multi_reduction <add>, %61, %cst_28 [1] : vector<1x256xf32> to vector<1xf32>
    %63 = vector.shape_cast %62 : vector<1xf32> to vector<1x1xf32>
    %cst_29 = arith.constant dense<0.000000e+00> : vector<1xf32>
    %64 = vector.multi_reduction <add>, %59, %cst_29 [1] : vector<1x256xf32> to vector<1xf32>
    %65 = vector.shape_cast %64 : vector<1xf32> to vector<1x1xf32>
    %c1_i32_30 = arith.constant 1 : i32
    %66 = vector.broadcast %c1_i32_30 : i32 to vector<1x256xi32>
    %67 = arith.cmpi eq, %27, %66 : vector<1x256xi32>
    %68 = arith.select %67, %33, %32 : vector<1x256xi1>, vector<1x256xf32>
    %c255_i32_31 = arith.constant 255 : i32
    %69 = vector.broadcast %c255_i32_31 : i32 to vector<1x256xi32>
    %70 = arith.cmpi ne, %27, %69 : vector<1x256xi32>
    %c0_i32_32 = arith.constant 0 : i32
    %71 = vector.broadcast %c0_i32_32 : i32 to vector<1x256xi32>
    %72 = arith.cmpi sge, %27, %71 : vector<1x256xi32>
    %73 = arith.andi %70, %72 : vector<1x256xi1>
    %74 = arith.extui %73 : vector<1x256xi1> to vector<1x256xi32>
    %75 = arith.sitofp %74 : vector<1x256xi32> to vector<1x256xf32>
    %76 = arith.subf %49, %68 : vector<1x256xf32>
    %77 = arith.mulf %76, %75 : vector<1x256xf32>
    %cst_33 = arith.constant dense<0.000000e+00> : vector<1xf32>
    %78 = vector.multi_reduction <add>, %77, %cst_33 [1] : vector<1x256xf32> to vector<1xf32>
    %79 = vector.shape_cast %78 : vector<1xf32> to vector<1x1xf32>
    %cst_34 = arith.constant dense<0.000000e+00> : vector<1xf32>
    %80 = vector.multi_reduction <add>, %75, %cst_34 [1] : vector<1x256xf32> to vector<1xf32>
    %81 = vector.shape_cast %80 : vector<1xf32> to vector<1x1xf32>
    %82 = arith.cmpf ogt, %31, %30 : vector<1x256xf32>
    %83 = arith.extui %82 : vector<1x256xi1> to vector<1x256xi32>
    %c0_i32_35 = arith.constant 0 : i32
    %84 = vector.broadcast %c0_i32_35 : i32 to vector<1x256xi32>
    %85 = arith.cmpi sge, %27, %84 : vector<1x256xi32>
    %86 = arith.extui %85 : vector<1x256xi1> to vector<1x256xi32>
    %87 = arith.sitofp %86 : vector<1x256xi32> to vector<1x256xf32>
    %88 = arith.cmpi eq, %83, %27 : vector<1x256xi32>
    %89 = arith.extui %88 : vector<1x256xi1> to vector<1x256xi32>
    %90 = arith.sitofp %89 : vector<1x256xi32> to vector<1x256xf32>
    %91 = arith.mulf %87, %90 : vector<1x256xf32>
    %cst_36 = arith.constant dense<0.000000e+00> : vector<1xf32>
    %92 = vector.multi_reduction <add>, %91, %cst_36 [1] : vector<1x256xf32> to vector<1xf32>
    %93 = vector.shape_cast %92 : vector<1xf32> to vector<1x1xf32>
    %cst_37 = arith.constant dense<0.000000e+00> : vector<1xf32>
    %94 = vector.multi_reduction <add>, %87, %cst_37 [1] : vector<1x256xf32> to vector<1xf32>
    %95 = vector.shape_cast %94 : vector<1xf32> to vector<1x1xf32>
    %cst_38 = arith.constant 0.000000e+00 : f32
    %96 = vector.broadcast %cst_38 : f32 to vector<1x256xf32>
    %97 = arith.maximumf %19, %96 : vector<1x256xf32>
    %98 = arith.mulf %19, %29 : vector<1x256xf32>
    %99 = arith.subf %97, %98 : vector<1x256xf32>
    %100 = math.absf %19 : vector<1x256xf32>
    %cst_39 = arith.constant 0.000000e+00 : f32
    %101 = vector.broadcast %cst_39 : f32 to vector<1x256xf32>
    %102 = arith.subf %101, %100 : vector<1x256xf32>
    %103 = math.exp %102 : vector<1x256xf32>
    %104 = math.log1p %103 : vector<1x256xf32>
    %105 = arith.addf %99, %104 : vector<1x256xf32>
    %cst_40 = arith.constant dense<0.000000e+00> : vector<1xf32>
    %106 = vector.multi_reduction <add>, %105, %cst_40 [1] : vector<1x256xf32> to vector<1xf32>
    %107 = vector.shape_cast %106 : vector<1xf32> to vector<1x1xf32>
    %cst_41 = arith.constant 1.38629436 : f32
    %108 = vector.broadcast %cst_41 : f32 to vector<1x256xf32>
    %109 = arith.cmpf ogt, %19, %108 : vector<1x256xf32>
    %c255_i32_42 = arith.constant 255 : i32
    %110 = vector.broadcast %c255_i32_42 : i32 to vector<1x256xi32>
    %111 = arith.select %109, %27, %110 : vector<1x256xi1>, vector<1x256xi32>
    %c1_i32_43 = arith.constant 1 : i32
    %112 = vector.broadcast %c1_i32_43 : i32 to vector<1x256xi32>
    %113 = arith.cmpi eq, %111, %112 : vector<1x256xi32>
    %114 = arith.select %113, %33, %32 : vector<1x256xi1>, vector<1x256xf32>
    %c255_i32_44 = arith.constant 255 : i32
    %115 = vector.broadcast %c255_i32_44 : i32 to vector<1x256xi32>
    %116 = arith.cmpi ne, %111, %115 : vector<1x256xi32>
    %c0_i32_45 = arith.constant 0 : i32
    %117 = vector.broadcast %c0_i32_45 : i32 to vector<1x256xi32>
    %118 = arith.cmpi sge, %111, %117 : vector<1x256xi32>
    %119 = arith.andi %116, %118 : vector<1x256xi1>
    %120 = arith.extui %119 : vector<1x256xi1> to vector<1x256xi32>
    %121 = arith.sitofp %120 : vector<1x256xi32> to vector<1x256xf32>
    %122 = arith.subf %49, %114 : vector<1x256xf32>
    %123 = arith.mulf %122, %121 : vector<1x256xf32>
    %cst_46 = arith.constant dense<0.000000e+00> : vector<1xf32>
    %124 = vector.multi_reduction <add>, %123, %cst_46 [1] : vector<1x256xf32> to vector<1xf32>
    %125 = vector.shape_cast %124 : vector<1xf32> to vector<1x1xf32>
    %cst_47 = arith.constant dense<0.000000e+00> : vector<1xf32>
    %126 = vector.multi_reduction <add>, %121, %cst_47 [1] : vector<1x256xf32> to vector<1xf32>
    %127 = vector.shape_cast %126 : vector<1xf32> to vector<1x1xf32>
    %128 = tpu.iota {dimensions = array<i32: 2>} : vector<1x8x128xi32>
    %cst_48 = arith.constant 0.000000e+00 : f32
    %129 = vector.broadcast %cst_48 : f32 to vector<1x8x128xf32>
    %c0_i32_49 = arith.constant 0 : i32
    %130 = vector.broadcast %c0_i32_49 : i32 to vector<1x8x128xi32>
    %131 = arith.cmpi eq, %128, %130 : vector<1x8x128xi32>
    %cst_50 = arith.constant 0.000000e+00 : f32
    %132 = vector.shape_cast %63 : vector<1x1xf32> to vector<1x1x1xf32>
    %133 = vector.broadcast %132 : vector<1x1x1xf32> to vector<1x8x128xf32>
    %134 = vector.broadcast %cst_50 : f32 to vector<1x8x128xf32>
    %135 = arith.select %131, %133, %134 : vector<1x8x128xi1>, vector<1x8x128xf32>
    %136 = arith.addf %129, %135 : vector<1x8x128xf32>
    %c1_i32_51 = arith.constant 1 : i32
    %137 = vector.broadcast %c1_i32_51 : i32 to vector<1x8x128xi32>
    %138 = arith.cmpi eq, %128, %137 : vector<1x8x128xi32>
    %cst_52 = arith.constant 0.000000e+00 : f32
    %139 = vector.shape_cast %65 : vector<1x1xf32> to vector<1x1x1xf32>
    %140 = vector.broadcast %139 : vector<1x1x1xf32> to vector<1x8x128xf32>
    %141 = vector.broadcast %cst_52 : f32 to vector<1x8x128xf32>
    %142 = arith.select %138, %140, %141 : vector<1x8x128xi1>, vector<1x8x128xf32>
    %143 = arith.addf %136, %142 : vector<1x8x128xf32>
    %c2_i32 = arith.constant 2 : i32
    %144 = vector.broadcast %c2_i32 : i32 to vector<1x8x128xi32>
    %145 = arith.cmpi eq, %128, %144 : vector<1x8x128xi32>
    %cst_53 = arith.constant 0.000000e+00 : f32
    %146 = vector.shape_cast %79 : vector<1x1xf32> to vector<1x1x1xf32>
    %147 = vector.broadcast %146 : vector<1x1x1xf32> to vector<1x8x128xf32>
    %148 = vector.broadcast %cst_53 : f32 to vector<1x8x128xf32>
    %149 = arith.select %145, %147, %148 : vector<1x8x128xi1>, vector<1x8x128xf32>
    %150 = arith.addf %143, %149 : vector<1x8x128xf32>
    %c3_i32 = arith.constant 3 : i32
    %151 = vector.broadcast %c3_i32 : i32 to vector<1x8x128xi32>
    %152 = arith.cmpi eq, %128, %151 : vector<1x8x128xi32>
    %cst_54 = arith.constant 0.000000e+00 : f32
    %153 = vector.shape_cast %81 : vector<1x1xf32> to vector<1x1x1xf32>
    %154 = vector.broadcast %153 : vector<1x1x1xf32> to vector<1x8x128xf32>
    %155 = vector.broadcast %cst_54 : f32 to vector<1x8x128xf32>
    %156 = arith.select %152, %154, %155 : vector<1x8x128xi1>, vector<1x8x128xf32>
    %157 = arith.addf %150, %156 : vector<1x8x128xf32>
    %c4_i32 = arith.constant 4 : i32
    %158 = vector.broadcast %c4_i32 : i32 to vector<1x8x128xi32>
    %159 = arith.cmpi eq, %128, %158 : vector<1x8x128xi32>
    %cst_55 = arith.constant 0.000000e+00 : f32
    %160 = vector.shape_cast %93 : vector<1x1xf32> to vector<1x1x1xf32>
    %161 = vector.broadcast %160 : vector<1x1x1xf32> to vector<1x8x128xf32>
    %162 = vector.broadcast %cst_55 : f32 to vector<1x8x128xf32>
    %163 = arith.select %159, %161, %162 : vector<1x8x128xi1>, vector<1x8x128xf32>
    %164 = arith.addf %157, %163 : vector<1x8x128xf32>
    %c5_i32 = arith.constant 5 : i32
    %165 = vector.broadcast %c5_i32 : i32 to vector<1x8x128xi32>
    %166 = arith.cmpi eq, %128, %165 : vector<1x8x128xi32>
    %cst_56 = arith.constant 0.000000e+00 : f32
    %167 = vector.shape_cast %95 : vector<1x1xf32> to vector<1x1x1xf32>
    %168 = vector.broadcast %167 : vector<1x1x1xf32> to vector<1x8x128xf32>
    %169 = vector.broadcast %cst_56 : f32 to vector<1x8x128xf32>
    %170 = arith.select %166, %168, %169 : vector<1x8x128xi1>, vector<1x8x128xf32>
    %171 = arith.addf %164, %170 : vector<1x8x128xf32>
    %c6_i32 = arith.constant 6 : i32
    %172 = vector.broadcast %c6_i32 : i32 to vector<1x8x128xi32>
    %173 = arith.cmpi eq, %128, %172 : vector<1x8x128xi32>
    %cst_57 = arith.constant 0.000000e+00 : f32
    %174 = vector.shape_cast %107 : vector<1x1xf32> to vector<1x1x1xf32>
    %175 = vector.broadcast %174 : vector<1x1x1xf32> to vector<1x8x128xf32>
    %176 = vector.broadcast %cst_57 : f32 to vector<1x8x128xf32>
    %177 = arith.select %173, %175, %176 : vector<1x8x128xi1>, vector<1x8x128xf32>
    %178 = arith.addf %171, %177 : vector<1x8x128xf32>
    %c7_i32 = arith.constant 7 : i32
    %179 = vector.broadcast %c7_i32 : i32 to vector<1x8x128xi32>
    %180 = arith.cmpi eq, %128, %179 : vector<1x8x128xi32>
    %cst_58 = arith.constant 0.000000e+00 : f32
    %181 = vector.shape_cast %125 : vector<1x1xf32> to vector<1x1x1xf32>
    %182 = vector.broadcast %181 : vector<1x1x1xf32> to vector<1x8x128xf32>
    %183 = vector.broadcast %cst_58 : f32 to vector<1x8x128xf32>
    %184 = arith.select %180, %182, %183 : vector<1x8x128xi1>, vector<1x8x128xf32>
    %185 = arith.addf %178, %184 : vector<1x8x128xf32>
    %c8_i32 = arith.constant 8 : i32
    %186 = vector.broadcast %c8_i32 : i32 to vector<1x8x128xi32>
    %187 = arith.cmpi eq, %128, %186 : vector<1x8x128xi32>
    %cst_59 = arith.constant 0.000000e+00 : f32
    %188 = vector.shape_cast %127 : vector<1x1xf32> to vector<1x1x1xf32>
    %189 = vector.broadcast %188 : vector<1x1x1xf32> to vector<1x8x128xf32>
    %190 = vector.broadcast %cst_59 : f32 to vector<1x8x128xf32>
    %191 = arith.select %187, %189, %190 : vector<1x8x128xi1>, vector<1x8x128xf32>
    %192 = arith.addf %185, %191 : vector<1x8x128xf32>
    %c0_60 = arith.constant 0 : index
    %c0_61 = arith.constant 0 : index
    %c0_62 = arith.constant 0 : index
    %193 = vector.load %arg11[%c0_60, %c0_61, %c0_62] : memref<1x8x128xf32, #tpu.memory_space<vmem>>, vector<1x8x128xf32>
    %194 = arith.addf %193, %192 : vector<1x8x128xf32>
    %c0_63 = arith.constant 0 : index
    %c0_64 = arith.constant 0 : index
    %c0_65 = arith.constant 0 : index
    %195 = vector.load %arg11[%c0_63, %c0_64, %c0_65] : memref<1x8x128xf32, #tpu.memory_space<vmem>>, vector<1x8x128xf32>
    tpu.vector_store %arg11[%c0_63, %c0_64, %c0_65], %194 {strides = array<i32>} : memref<1x8x128xf32, #tpu.memory_space<vmem>>, vector<1x8x128xf32>,
    return
  }
  func.func @transform_0(%arg0: i32, %arg1: i32) -> (i32, i32, i32) {
    %c0_i32 = arith.constant 0 : i32
    %c0_i32_0 = arith.constant 0 : i32
    return %arg0, %c0_i32, %arg1 : i32, i32, i32
  }
  func.func @transform_1(%arg0: i32, %arg1: i32) -> (i32, i32) {
    %c0_i32 = arith.constant 0 : i32
    %c0_i32_0 = arith.constant 0 : i32
    %c0_i32_1 = arith.constant 0 : i32
    return %c0_i32, %c0_i32_0 : i32, i32
  }
  func.func @transform_2(%arg0: i32, %arg1: i32) -> (i32, i32) {
    %c0_i32 = arith.constant 0 : i32
    %c0_i32_0 = arith.constant 0 : i32
    %c0_i32_1 = arith.constant 0 : i32
    return %c0_i32, %c0_i32_0 : i32, i32
  }
  func.func @transform_3(%arg0: i32, %arg1: i32) -> (i32, i32) {
    %c0_i32 = arith.constant 0 : i32
    %c0_i32_0 = arith.constant 0 : i32
    %c0_i32_1 = arith.constant 0 : i32
    return %c0_i32, %c0_i32_0 : i32, i32
  }
  func.func @transform_4(%arg0: i32, %arg1: i32) -> (i32, i32) {
    %c0_i32 = arith.constant 0 : i32
    %c0_i32_0 = arith.constant 0 : i32
    %c0_i32_1 = arith.constant 0 : i32
    return %c0_i32, %c0_i32_0 : i32, i32
  }
  func.func @transform_5(%arg0: i32, %arg1: i32) -> (i32, i32, i32) {
    %c0_i32 = arith.constant 0 : i32
    %c0_i32_0 = arith.constant 0 : i32
    return %arg0, %c0_i32, %arg1 : i32, i32, i32
  }
  func.func @transform_6(%arg0: i32, %arg1: i32) -> (i32, i32, i32) {
    %c0_i32 = arith.constant 0 : i32
    %c0_i32_0 = arith.constant 0 : i32
    return %arg0, %c0_i32, %arg1 : i32, i32, i32
  }
  func.func @transform_7(%arg0: i32, %arg1: i32) -> (i32, i32, i32) {
    %c0_i32 = arith.constant 0 : i32
    %c0_i32_0 = arith.constant 0 : i32
    return %arg0, %c0_i32, %arg1 : i32, i32, i32
  }
  func.func @transform_8(%arg0: i32, %arg1: i32) -> (i32, i32, i32) {
    %c0_i32 = arith.constant 0 : i32
    %c0_i32_0 = arith.constant 0 : i32
    return %arg0, %c0_i32, %arg1 : i32, i32, i32
  }
  func.func @transform_9(%arg0: i32, %arg1: i32) -> (i32, i32, i32) {
    %c0_i32 = arith.constant 0 : i32
    %c0_i32_0 = arith.constant 0 : i32
    %c0_i32_1 = arith.constant 0 : i32
    return %arg0, %c0_i32, %c0_i32_0 : i32, i32, i32
  }
}

</mosaic_0001>

<llo_original>
// kernel: full_model_forward.1
$region0: #{full_model_forward.1}
  #allocation0 [shape = 'u32[]', space=smem, size = 0x4, offset = 0x4, fixed_abs, tag = 'smem constant byte address 0x4 - core index']
  #allocation1 [shape = 'u32[144,128]{1,0:T(1,128)}', space=vmem, size = 0x12000, scoped, tag = 'internal scratch']
  %s0 = inlined_call_operand.vmem [shape: f32[2,3,256], index: 0, kind: input, shape index: {}]
  %s1 = inlined_call_operand.vmem [shape: f32[32,3], index: 1, kind: input, shape index: {}]
  %s2 = inlined_call_operand.vmem [shape: f32[32,1], index: 2, kind: input, shape index: {}]
  %s3 = inlined_call_operand.vmem [shape: f32[5,32], index: 3, kind: input, shape index: {}]
  %s4 = inlined_call_operand.vmem [shape: f32[5,1], index: 4, kind: input, shape index: {}]
  %s5 = inlined_call_operand.vmem [shape: s32[2,1,256], index: 5, kind: input, shape index: {}]
  %s6 = inlined_call_operand.vmem [shape: f32[2,1,256], index: 6, kind: input, shape index: {}]
  %s7 = inlined_call_operand.vmem [shape: f32[2,2,256], index: 7, kind: output, shape index: {0}]
  %s8 = inlined_call_operand.vmem [shape: f32[2,2,256], index: 8, kind: output, shape index: {1}]
  %s9 = inlined_call_operand.vmem [shape: f32[2,8,128], index: 9, kind: output, shape index: {2}]
  %10 = xla_tuple %s7, %s8, %s9
  %s11 = sld [smem:[#allocation0]]
  $region81: #{full_model_forward.1} parent=0
    _
  %s13 = ssub.s32 1, %s11
  %s14 = scalar_select 0, %s13, %s11
  loop: start=0, step=1, limit=4
  $region2: #{full_model_forward.1} parent=0 // loop_pre_header
    _
  $region3: #{full_model_forward.1} parent=0 // loop_header
    %s16 = sphi 0, %s20
    %p17 = scmp.ge.s32.totalorder %s16, 4
    %s23 = sphi 0, %s35
    %s24 = sphi 0, %s31
    %s25 = sphi 0, %s23
    %s26 = sphi 0, %s24
    %s27 = sphi 0, %s25
    %s28 = sphi 0, %s26
    %s40 = sphi 0, %s42
    %s43 = sphi 0, %s40
    %s44 = sphi 0, %s43
    %s60 = sphi 0, %s44
    %s64 = sphi 0, %s64
    %s66 = sphi 0, %s64
    %s67 = sphi 0, %s66
    %s81 = sphi 0, %s67
    %s85 = sphi 0, %s85
    %s87 = sphi 0, %s85
    %s88 = sphi 0, %s87
    %s102 = sphi 0, %s88
    %s106 = sphi 0, %s106
    %s108 = sphi 0, %s106
    %s109 = sphi 0, %s108
    %s123 = sphi 0, %s109
    %s127 = sphi 0, %s127
    %s129 = sphi 0, %s127
    %s130 = sphi 0, %s129
    %s144 = sphi 0, %s130
    %s152 = sphi 0, %s154
    %s155 = sphi 0, %s152
    %s156 = sphi 0, %s155
    %s172 = sphi 0, %s156
    %s180 = sphi 0, %s182
    %s183 = sphi 0, %s180
    %s184 = sphi 0, %s183
    %s200 = sphi 0, %s184
    %s208 = sphi 0, %s210
    %s211 = sphi 0, %s208
    %s212 = sphi 0, %s211
    %s228 = sphi 0, %s212
    %s236 = sphi 0, %s238
    %s239 = sphi 0, %s236
    %s240 = sphi 0, %s239
    %s256 = sphi 0, %s240
    %s262 = sphi 0, %s264
    %s265 = sphi 0, %s262
    %s266 = sphi 0, %s265
    %s282 = sphi 0, %s266
  $region4: #{full_model_forward.1} parent=0 // loop_header_branch
    %19 = sbr.rel (%p17) target = $region8
  $region5: #{full_model_forward.1} parent=0 // loop_body
    %s21 = ssub.s32 %s16, 1
    %s22 = ssub.s32 %s16, 2
    %s29 = sadd.s32 1, %s24
    %p30 = scmp.ge.s32.totalorder %s29, 1
    %s31 = scalar_select %p30, 0, %s29
    %s32 = sadd.s32 1, %s23
    %s33 = scalar_select %p30, %s32, %s23
    %p34 = scmp.ge.s32.totalorder %s33, 2
    %s35 = scalar_select %p34, 0, %s33
    %s36 = ssub.s32 %s23, %s35
    %s37 = ssub.s32 %s24, %s31
    %s38 = sor.u32 %s36, %s37
    %p39 = scmp.eq.s32.totalorder %s38, 0
    %s41 = sadd.s32 %s40, 1
    %s42 = scalar_select %p39, %s40, %s41
    %p45 = pneg %p39
    %p46 = scmp.eq.s32.totalorder %s16, 1
    %p47 = por %p45, %p46
    %p48 = scmp.ne.s32.totalorder %s40, %s43
    %p49 = scmp.eq.s32.totalorder %s16, 0
    %p50 = por %p48, %p49
    %p51 = scmp.ne.s32.totalorder %s40, %s43
    %p52 = scmp.eq.s32.totalorder %s21, 1
    %p53 = por %p51, %p52
    %p54 = scmp.ne.s32.totalorder %s43, %s44
    %p55 = scmp.eq.s32.totalorder %s21, 0
    %p56 = por %p54, %p55
    %p57 = scmp.ne.s32.totalorder %s43, %s44
    %p58 = scmp.eq.s32.totalorder %s22, 1
    %p59 = por %p57, %p58
    %p61 = scmp.ne.s32.totalorder %s44, %s60
    %p62 = scmp.eq.s32.totalorder %s22, 0
    %p63 = por %p61, %p62
    %s65 = sadd.s32 %s64, 1
    %p68 = scmp.eq.s32.totalorder %s16, 1
    %p69 = scmp.ne.s32.totalorder %s64, %s66
    %p70 = scmp.eq.s32.totalorder %s16, 0
    %p71 = por %p69, %p70
    %p72 = scmp.ne.s32.totalorder %s64, %s66
    %p73 = scmp.eq.s32.totalorder %s21, 1
    %p74 = por %p72, %p73
    %p75 = scmp.ne.s32.totalorder %s66, %s67
    %p76 = scmp.eq.s32.totalorder %s21, 0
    %p77 = por %p75, %p76
    %p78 = scmp.ne.s32.totalorder %s66, %s67
    %p79 = scmp.eq.s32.totalorder %s22, 1
    %p80 = por %p78, %p79
    %p82 = scmp.ne.s32.totalorder %s67, %s81
    %p83 = scmp.eq.s32.totalorder %s22, 0
    %p84 = por %p82, %p83
    %s86 = sadd.s32 %s85, 1
    %p89 = scmp.eq.s32.totalorder %s16, 1
    %p90 = scmp.ne.s32.totalorder %s85, %s87
    %p91 = scmp.eq.s32.totalorder %s16, 0
    %p92 = por %p90, %p91
    %p93 = scmp.ne.s32.totalorder %s85, %s87
    %p94 = scmp.eq.s32.totalorder %s21, 1
    %p95 = por %p93, %p94
    %p96 = scmp.ne.s32.totalorder %s87, %s88
    %p97 = scmp.eq.s32.totalorder %s21, 0
    %p98 = por %p96, %p97
    %p99 = scmp.ne.s32.totalorder %s87, %s88
    %p100 = scmp.eq.s32.totalorder %s22, 1
    %p101 = por %p99, %p100
    %p103 = scmp.ne.s32.totalorder %s88, %s102
    %p104 = scmp.eq.s32.totalorder %s22, 0
    %p105 = por %p103, %p104
    %s107 = sadd.s32 %s106, 1
    %p110 = scmp.eq.s32.totalorder %s16, 1
    %p111 = scmp.ne.s32.totalorder %s106, %s108
    %p112 = scmp.eq.s32.totalorder %s16, 0
    %p113 = por %p111, %p112
    %p114 = scmp.ne.s32.totalorder %s106, %s108
    %p115 = scmp.eq.s32.totalorder %s21, 1
    %p116 = por %p114, %p115
    %p117 = scmp.ne.s32.totalorder %s108, %s109
    %p118 = scmp.eq.s32.totalorder %s21, 0
    %p119 = por %p117, %p118
    %p120 = scmp.ne.s32.totalorder %s108, %s109
    %p121 = scmp.eq.s32.totalorder %s22, 1
    %p122 = por %p120, %p121
    %p124 = scmp.ne.s32.totalorder %s109, %s123
    %p125 = scmp.eq.s32.totalorder %s22, 0
    %p126 = por %p124, %p125
    %s128 = sadd.s32 %s127, 1
    %p131 = scmp.eq.s32.totalorder %s16, 1
    %p132 = scmp.ne.s32.totalorder %s127, %s129
    %p133 = scmp.eq.s32.totalorder %s16, 0
    %p134 = por %p132, %p133
    %p135 = scmp.ne.s32.totalorder %s127, %s129
    %p136 = scmp.eq.s32.totalorder %s21, 1
    %p137 = por %p135, %p136
    %p138 = scmp.ne.s32.totalorder %s129, %s130
    %p139 = scmp.eq.s32.totalorder %s21, 0
    %p140 = por %p138, %p139
    %p141 = scmp.ne.s32.totalorder %s129, %s130
    %p142 = scmp.eq.s32.totalorder %s22, 1
    %p143 = por %p141, %p142
    %p145 = scmp.ne.s32.totalorder %s130, %s144
    %p146 = scmp.eq.s32.totalorder %s22, 0
    %p147 = por %p145, %p146
    %s148 = ssub.s32 %s23, %s35
    %s149 = ssub.s32 %s24, %s31
    %s150 = sor.u32 %s148, %s149
    %p151 = scmp.eq.s32.totalorder %s150, 0
    %s153 = sadd.s32 %s152, 1
    %s154 = scalar_select %p151, %s152, %s153
    %p157 = pneg %p151
    %p158 = scmp.eq.s32.totalorder %s16, 1
    %p159 = por %p157, %p158
    %p160 = scmp.ne.s32.totalorder %s152, %s155
    %p161 = scmp.eq.s32.totalorder %s16, 0
    %p162 = por %p160, %p161
    %p163 = scmp.ne.s32.totalorder %s152, %s155
    %p164 = scmp.eq.s32.totalorder %s21, 1
    %p165 = por %p163, %p164
    %p166 = scmp.ne.s32.totalorder %s155, %s156
    %p167 = scmp.eq.s32.totalorder %s21, 0
    %p168 = por %p166, %p167
    %p169 = scmp.ne.s32.totalorder %s155, %s156
    %p170 = scmp.eq.s32.totalorder %s22, 1
    %p171 = por %p169, %p170
    %p173 = scmp.ne.s32.totalorder %s156, %s172
    %p174 = scmp.eq.s32.totalorder %s22, 0
    %p175 = por %p173, %p174
    %s176 = ssub.s32 %s23, %s35
    %s177 = ssub.s32 %s24, %s31
    %s178 = sor.u32 %s176, %s177
    %p179 = scmp.eq.s32.totalorder %s178, 0
    %s181 = sadd.s32 %s180, 1
    %s182 = scalar_select %p179, %s180, %s181
    %p185 = pneg %p179
    %p186 = scmp.eq.s32.totalorder %s16, 1
    %p187 = por %p185, %p186
    %p188 = scmp.ne.s32.totalorder %s180, %s183
    %p189 = scmp.eq.s32.totalorder %s16, 0
    %p190 = por %p188, %p189
    %p191 = scmp.ne.s32.totalorder %s180, %s183
    %p192 = scmp.eq.s32.totalorder %s21, 1
    %p193 = por %p191, %p192
    %p194 = scmp.ne.s32.totalorder %s183, %s184
    %p195 = scmp.eq.s32.totalorder %s21, 0
    %p196 = por %p194, %p195
    %p197 = scmp.ne.s32.totalorder %s183, %s184
    %p198 = scmp.eq.s32.totalorder %s22, 1
    %p199 = por %p197, %p198
    %p201 = scmp.ne.s32.totalorder %s184, %s200
    %p202 = scmp.eq.s32.totalorder %s22, 0
    %p203 = por %p201, %p202
    %s204 = ssub.s32 %s23, %s35
    %s205 = ssub.s32 %s24, %s31
    %s206 = sor.u32 %s204, %s205
    %p207 = scmp.eq.s32.totalorder %s206, 0
    %s209 = sadd.s32 %s208, 1
    %s210 = scalar_select %p207, %s208, %s209
    %p213 = pneg %p207
    %p214 = scmp.eq.s32.totalorder %s16, 1
    %p215 = por %p213, %p214
    %p216 = scmp.ne.s32.totalorder %s208, %s211
    %p217 = scmp.eq.s32.totalorder %s16, 0
    %p218 = por %p216, %p217
    %p219 = scmp.ne.s32.totalorder %s208, %s211
    %p220 = scmp.eq.s32.totalorder %s21, 1
    %p221 = por %p219, %p220
    %p222 = scmp.ne.s32.totalorder %s211, %s212
    %p223 = scmp.eq.s32.totalorder %s21, 0
    %p224 = por %p222, %p223
    %p225 = scmp.ne.s32.totalorder %s211, %s212
    %p226 = scmp.eq.s32.totalorder %s22, 1
    %p227 = por %p225, %p226
    %p229 = scmp.ne.s32.totalorder %s212, %s228
    %p230 = scmp.eq.s32.totalorder %s22, 0
    %p231 = por %p229, %p230
    %s232 = ssub.s32 %s23, %s35
    %s233 = ssub.s32 %s24, %s31
    %s234 = sor.u32 %s232, %s233
    %p235 = scmp.eq.s32.totalorder %s234, 0
    %s237 = sadd.s32 %s236, 1
    %s238 = scalar_select %p235, %s236, %s237
    %p241 = pneg %p235
    %p242 = scmp.eq.s32.totalorder %s16, 1
    %p243 = por %p241, %p242
    %p244 = scmp.ne.s32.totalorder %s236, %s239
    %p245 = scmp.eq.s32.totalorder %s16, 0
    %p246 = por %p244, %p245
    %p247 = scmp.ne.s32.totalorder %s236, %s239
    %p248 = scmp.eq.s32.totalorder %s21, 1
    %p249 = por %p247, %p248
    %p250 = scmp.ne.s32.totalorder %s239, %s240
    %p251 = scmp.eq.s32.totalorder %s21, 0
    %p252 = por %p250, %p251
    %p253 = scmp.ne.s32.totalorder %s239, %s240
    %p254 = scmp.eq.s32.totalorder %s22, 1
    %p255 = por %p253, %p254
    %p257 = scmp.ne.s32.totalorder %s240, %s256
    %p258 = scmp.eq.s32.totalorder %s22, 0
    %p259 = por %p257, %p258
    %s260 = ssub.s32 %s23, %s35
    %p261 = scmp.eq.s32.totalorder %s260, 0
    %s263 = sadd.s32 %s262, 1
    %s264 = scalar_select %p261, %s262, %s263
    %p267 = pneg %p261
    %p268 = scmp.eq.s32.totalorder %s16, 1
    %p269 = por %p267, %p268
    %p270 = scmp.ne.s32.totalorder %s262, %s265
    %p271 = scmp.eq.s32.totalorder %s16, 0
    %p272 = por %p270, %p271
    %p273 = scmp.ne.s32.totalorder %s262, %s265
    %p274 = scmp.eq.s32.totalorder %s21, 1
    %p275 = por %p273, %p274
    %p276 = scmp.ne.s32.totalorder %s265, %s266
    %p277 = scmp.eq.s32.totalorder %s21, 0
    %p278 = por %p276, %p277
    %p279 = scmp.ne.s32.totalorder %s265, %s266
    %p280 = scmp.eq.s32.totalorder %s22, 1
    %p281 = por %p279, %p280
    %p283 = scmp.ne.s32.totalorder %s266, %s282
    %p284 = scmp.eq.s32.totalorder %s22, 0
    %p285 = por %p283, %p284
    %p286 = scmp.le.s32.totalorder 1, %s16
    %p287 = scmp.lt.s32.totalorder %s16, 3
    %p288 = pnand %p286, %p287
    %p289 = pneg %p288
    // Predicated region
    $region9: #{full_model_forward.1} parent=5 // pred_check
      _
    $region10: #{full_model_forward.1} parent=5 // pred_check_branch
      %291 = sbr.rel (%p288) target = $region12
    $region11: #{full_model_forward.1} parent=5 // pred_region
      %s292 = ssub.s32 %s16, 1
      // Predicated region
      $region13: #{full_model_forward.1} parent=11 // pred_check
        %p293 = pneg %p77
      $region14: #{full_model_forward.1} parent=11 // pred_check_branch
        %295 = sbr.rel (%p293) target = $region16
      $region15: #{full_model_forward.1} parent=11 // pred_region
        _
      $region16: #{full_model_forward.1} parent=11 // pred_fallthru
        _
      // Predicated region
      $region17: #{full_model_forward.1} parent=11 // pred_check
        %p296 = pneg %p98
      $region18: #{full_model_forward.1} parent=11 // pred_check_branch
        %298 = sbr.rel (%p296) target = $region20
      $region19: #{full_model_forward.1} parent=11 // pred_region
        _
      $region20: #{full_model_forward.1} parent=11 // pred_fallthru
        _
      // Predicated region
      $region21: #{full_model_forward.1} parent=11 // pred_check
        %p299 = pneg %p119
      $region22: #{full_model_forward.1} parent=11 // pred_check_branch
        %301 = sbr.rel (%p299) target = $region24
      $region23: #{full_model_forward.1} parent=11 // pred_region
        _
      $region24: #{full_model_forward.1} parent=11 // pred_fallthru
        _
      // Predicated region
      $region25: #{full_model_forward.1} parent=11 // pred_check
        %p302 = pneg %p140
      $region26: #{full_model_forward.1} parent=11 // pred_check_branch
        %304 = sbr.rel (%p302) target = $region28
      $region27: #{full_model_forward.1} parent=11 // pred_region
        _
      $region28: #{full_model_forward.1} parent=11 // pred_fallthru
        _
    $region12: #{full_model_forward.1} parent=5 // pred_fallthru
      _
    %p305 = scmp.lt.s32.totalorder %s16, 2
    // Predicated region
    $region29: #{full_model_forward.1} parent=5 // pred_check
      %p306 = pneg %p305
    $region30: #{full_model_forward.1} parent=5 // pred_check_branch
      %308 = sbr.rel (%p306) target = $region32
    $region31: #{full_model_forward.1} parent=5 // pred_region
      // Predicated region
      $region33: #{full_model_forward.1} parent=31 // pred_check
        %p309 = pneg %p50
      $region34: #{full_model_forward.1} parent=31 // pred_check_branch
        %311 = sbr.rel (%p309) target = $region36
      $region35: #{full_model_forward.1} parent=31 // pred_region
        %s312 = smul.u32 2, %s24
        %p313 = scmp.lt.s32.totalorder %s23, 1
        %s314 = scalar_select %p313, %s23, 1
        %p315 = scmp.lt.s32.totalorder %s312, 1
        %s316 = scalar_select %p315, %s312, 1
        %s317 = smul.addr %s314, 2
        %s318 = sadd.s32 %s316, %s317
        %s319 = smul.addr %s318, 4
        %s320 = scalar_lea.vmem %s0, %s319
        %s321 = smul.u32 2, %s24
      $region36: #{full_model_forward.1} parent=31 // pred_fallthru
        _
      // Predicated region
      $region37: #{full_model_forward.1} parent=31 // pred_check
        %p322 = pneg %p162
      $region38: #{full_model_forward.1} parent=31 // pred_check_branch
        %324 = sbr.rel (%p322) target = $region40
      $region39: #{full_model_forward.1} parent=31 // pred_region
        %s325 = smul.u32 2, %s24
        %p326 = scmp.lt.s32.totalorder %s23, 1
        %s327 = scalar_select %p326, %s23, 1
        %p328 = scmp.lt.s32.totalorder %s325, 1
        %s329 = scalar_select %p328, %s325, 1
        %s330 = smul.addr %s327, 2
        %s331 = sadd.s32 %s329, %s330
        %s332 = scalar_lea.vmem %s5, %s331
        %s333 = smul.u32 2, %s24
      $region40: #{full_model_forward.1} parent=31 // pred_fallthru
        _
      // Predicated region
      $region41: #{full_model_forward.1} parent=31 // pred_check
        %p334 = pneg %p190
      $region42: #{full_model_forward.1} parent=31 // pred_check_branch
        %336 = sbr.rel (%p334) target = $region44
      $region43: #{full_model_forward.1} parent=31 // pred_region
        %s337 = smul.u32 2, %s24
        %p338 = scmp.lt.s32.totalorder %s23, 1
        %s339 = scalar_select %p338, %s23, 1
        %p340 = scmp.lt.s32.totalorder %s337, 1
        %s341 = scalar_select %p340, %s337, 1
        %s342 = smul.addr %s339, 2
        %s343 = sadd.s32 %s341, %s342
        %s344 = scalar_lea.vmem %s6, %s343
        %s345 = smul.u32 2, %s24
      $region44: #{full_model_forward.1} parent=31 // pred_fallthru
        _
    $region32: #{full_model_forward.1} parent=5 // pred_fallthru
      _
    %p346 = scmp.le.s32.totalorder 1, %s16
    %p347 = scmp.lt.s32.totalorder %s16, 3
    %p348 = pnand %p346, %p347
    %p349 = pneg %p348
    // Predicated region
    $region45: #{full_model_forward.1} parent=5 // pred_check
      _
    $region46: #{full_model_forward.1} parent=5 // pred_check_branch
      %351 = sbr.rel (%p348) target = $region48
    $region47: #{full_model_forward.1} parent=5 // pred_region
      %s352 = ssub.s32 %s16, 1
      %s353 = smul.u32 2, %s26
      %p354 = scmp.lt.s32.totalorder %s25, 1
      %s355 = scalar_select %p354, %s25, 1
      %p356 = scmp.lt.s32.totalorder %s353, 1
      %s357 = scalar_select %p356, %s353, 1
      %s358 = smul.addr %s355, 2
      %s359 = sadd.s32 %s357, %s358
      %s360 = smul.addr %s359, 4
      %s361 = scalar_lea.vmem %s0, %s360
      %p362 = pneg %p56
      %p363 = pneg %p53
      %p364 = pneg %p77
      %p365 = pneg %p74
      %p366 = pneg %p98
      %p367 = pneg %p95
      %p368 = pneg %p119
      %p369 = pneg %p116
      %p370 = pneg %p140
      %p371 = pneg %p137
      %s372 = smul.u32 2, %s26
      %p373 = scmp.lt.s32.totalorder %s25, 1
      %s374 = scalar_select %p373, %s25, 1
      %p375 = scmp.lt.s32.totalorder %s372, 1
      %s376 = scalar_select %p375, %s372, 1
      %s377 = smul.addr %s374, 2
      %s378 = sadd.s32 %s376, %s377
      %s379 = scalar_lea.vmem %s5, %s378
      %p380 = pneg %p168
      %p381 = pneg %p165
      %s382 = smul.u32 2, %s26
      %p383 = scmp.lt.s32.totalorder %s25, 1
      %s384 = scalar_select %p383, %s25, 1
      %p385 = scmp.lt.s32.totalorder %s382, 1
      %s386 = scalar_select %p385, %s382, 1
      %s387 = smul.addr %s384, 2
      %s388 = sadd.s32 %s386, %s387
      %s389 = scalar_lea.vmem %s6, %s388
      %p390 = pneg %p196
      %p391 = pneg %p193
      %p392 = pneg %p224
      %p393 = pneg %p221
      %s394 = smul.u32 2, %s26
      %p395 = scmp.lt.s32.totalorder %s25, 1
      %s396 = scalar_select %p395, %s25, 1
      %p397 = scmp.lt.s32.totalorder %s394, 1
      %s398 = scalar_select %p397, %s394, 1
      %s399 = smul.addr %s396, 2
      %s400 = sadd.s32 %s398, %s399
      %s401 = smul.addr %s400, 2
      %s402 = scalar_lea.vmem %s7, %s401
      %p403 = pneg %p252
      %p404 = pneg %p249
      %s405 = smul.u32 2, %s26
      %p406 = scmp.lt.s32.totalorder %s25, 1
      %s407 = scalar_select %p406, %s25, 1
      %p408 = scmp.lt.s32.totalorder %s405, 1
      %s409 = scalar_select %p408, %s405, 1
      %s410 = smul.addr %s407, 2
      %s411 = sadd.s32 %s409, %s410
      %s412 = smul.addr %s411, 2
      %s413 = scalar_lea.vmem %s8, %s412
      %p414 = pneg %p278
      %p415 = pneg %p275
      %p416 = scmp.lt.s32.totalorder %s25, 1
      %s417 = scalar_select %p416, %s25, 1
      %s418 = smul.addr %s417, 8
      %s419 = scalar_lea.vmem %s9, %s418
      %s420 = smul.u32 2, %s26
      %p421 = scmp.lt.s32.totalorder %s25, 1
      %s422 = scalar_select %p421, %s25, 1
      %p423 = scmp.lt.s32.totalorder %s420, 1
      %s424 = scalar_select %p423, %s420, 1
      %s425 = smul.addr %s422, 2
      %s426 = sadd.s32 %s424, %s425
      %s427 = smul.addr %s426, 4
      %s428 = scalar_lea.vmem %s0, %s427
      %s429 = smul.u32 2, %s26
      %s430 = smul.u32 2, %s26
      %p431 = scmp.lt.s32.totalorder %s25, 1
      %s432 = scalar_select %p431, %s25, 1
      %p433 = scmp.lt.s32.totalorder %s430, 1
      %s434 = scalar_select %p433, %s430, 1
      %s435 = smul.addr %s432, 2
      %s436 = sadd.s32 %s434, %s435
      %s437 = scalar_lea.vmem %s5, %s436
      %s438 = smul.u32 2, %s26
      %s439 = smul.u32 2, %s26
      %p440 = scmp.lt.s32.totalorder %s25, 1
      %s441 = scalar_select %p440, %s25, 1
      %p442 = scmp.lt.s32.totalorder %s439, 1
      %s443 = scalar_select %p442, %s439, 1
      %s444 = smul.addr %s441, 2
      %s445 = sadd.s32 %s443, %s444
      %s446 = scalar_lea.vmem %s6, %s445
      %s447 = smul.u32 2, %s26
      %s448 = smul.u32 2, %s26
      %p449 = scmp.lt.s32.totalorder %s25, 1
      %s450 = scalar_select %p449, %s25, 1
      %p451 = scmp.lt.s32.totalorder %s448, 1
      %s452 = scalar_select %p451, %s448, 1
      %s453 = smul.addr %s450, 2
      %s454 = sadd.s32 %s452, %s453
      %s455 = smul.addr %s454, 2
      %s456 = scalar_lea.vmem %s7, %s455
      %s457 = smul.u32 2, %s26
      %s458 = smul.u32 2, %s26
      %p459 = scmp.lt.s32.totalorder %s25, 1
      %s460 = scalar_select %p459, %s25, 1
      %p461 = scmp.lt.s32.totalorder %s458, 1
      %s462 = scalar_select %p461, %s458, 1
      %s463 = smul.addr %s460, 2
      %s464 = sadd.s32 %s462, %s463
      %s465 = smul.addr %s464, 2
      %s466 = scalar_lea.vmem %s8, %s465
      %s467 = smul.u32 2, %s26
      %p468 = scmp.lt.s32.totalorder %s25, 1
      %s469 = scalar_select %p468, %s25, 1
      %s470 = smul.addr %s469, 8
      %s471 = scalar_lea.vmem %s9, %s470
      %p472 = scmp.eq.s32.totalorder %s26, 0
      // Predicated region
      $region49: #{full_model_forward.1} parent=47 // pred_check
        %p473 = pneg %p472
      $region50: #{full_model_forward.1} parent=47 // pred_check_branch
        %475 = sbr.rel (%p473) target = $region52
      $region51: #{full_model_forward.1} parent=47 // pred_region
        %476 = vst [vmem:[%s471] sm:$0xff] 0.0
      $region52: #{full_model_forward.1} parent=47 // pred_fallthru
        _
      %v477 = vld [vmem:[%s428] sm:$0x77]
      %v478 = vld [vmem:[%s1] sm:$0xff]
      %v479 = vld [vmem:[%s1 + $0x8] sm:$0xff]
      %v480 = vld [vmem:[%s1 + $0x10] sm:$0xff]
      %v481 = vld [vmem:[%s1 + $0x18] sm:$0xff]
      %v482 = vld [vmem:[%s2] sm:$0xff]
      %v483 = vld [vmem:[%s2 + $0x8] sm:$0xff]
      %v484 = vld [vmem:[%s2 + $0x10] sm:$0xff]
      %v485 = vld [vmem:[%s2 + $0x18] sm:$0xff]
      %487 = vset.pattern.permute.xlu0 0
      %488 = vperm.xlu0 %487, %v482
      %v489 = vpop.permute.xlu0 %488
      %492 = vset.pattern.permute.xlu0 0
      %493 = vperm.xlu0 %492, %v483
      %v494 = vpop.permute.xlu0 %493
      %497 = vset.pattern.permute.xlu0 0
      %498 = vperm.xlu0 %497, %v484
      %v499 = vpop.permute.xlu0 %498
      %502 = vset.pattern.permute.xlu0 0
      %503 = vperm.xlu0 %502, %v485
      %v504 = vpop.permute.xlu0 %503
      %v507 = vcombine.high %v477, %v477
      %vm508 = vcmask 23552
      %v510 = vsel %vm508, %v478, 0
      %v513 = vsel %vm508, %v479, 0
      %v516 = vsel %vm508, %v480, 0
      %v519 = vsel %vm508, %v481, 0
      %vm521 = vcmask 1042432
      %v522 = vsel %vm521, %v477, 0
      %v524 = vsel %vm521, %v507, 0
      %526 = vmatprep.subr.mxu0 0.0
      %527 = vmatpush1.msra.mxu0 0.0
      %528 = vmatprep.subr.mxu0 0.0
      %529 = vmatpush1.msra.mxu0 0.0
      %530 = vmatprep.subr.mxu0 0.0
      %531 = vmatpush1.msra.mxu0 0.0
      %532 = vmatprep.subr.mxu0 0.0
      %533 = vmatpush1.msra.mxu0 0.0
      %534 = vmatprep.subr.mxu0 0.0
      %535 = vmatpush1.msra.mxu0 0.0
      %536 = vmatprep.subr.mxu0 0.0
      %537 = vmatpush1.msra.mxu0 0.0
      %538 = vmatprep.subr.mxu0 0.0
      %539 = vmatpush1.msra.mxu0 0.0
      %540 = vmatprep.subr.mxu0 0.0
      %541 = vmatpush1.msra.mxu0 0.0
      %542 = vmatprep.subr.mxu0 0.0
      %543 = vmatpush1.msra.mxu0 0.0
      %544 = vmatprep.subr.mxu0 0.0
      %545 = vmatpush1.msra.mxu0 0.0
      %546 = vmatprep.subr.mxu0 0.0
      %547 = vmatpush1.msra.mxu0 0.0
      %548 = vmatprep.subr.mxu0 0.0
      %549 = vmatpush1.msra.mxu0 0.0
      %550 = vmatprep.subr.mxu0 0.0
      %551 = vmatpush1.msra.mxu0 0.0
      %552 = vmatprep.subr.mxu0 0.0
      %553 = vmatpush1.msra.mxu0 0.0
      %554 = vmatprep.subr.mxu0 0.0
      %555 = vmatpush1.msra.mxu0 0.0
      %556 = vmatprep.subr.mxu0 %v524
      %557 = vmatpush1.msra.mxu0 %v522
      %558 = vmatprep.subr.mxu0 0.0
      %559 = vmatpush2.msra.mxu0 0.0
      %560 = vmatprep.subr.mxu0 0.0
      %561 = vmatpush2.msra.mxu0 0.0
      %562 = vmatprep.subr.mxu0 0.0
      %563 = vmatpush2.msra.mxu0 0.0
      %564 = vmatprep.subr.mxu0 0.0
      %565 = vmatpush2.msra.mxu0 0.0
      %566 = vmatprep.subr.mxu0 0.0
      %567 = vmatpush2.msra.mxu0 0.0
      %568 = vmatprep.subr.mxu0 0.0
      %569 = vmatpush2.msra.mxu0 0.0
      %570 = vmatprep.subr.mxu0 0.0
      %571 = vmatpush2.msra.mxu0 0.0
      %572 = vmatprep.subr.mxu0 0.0
      %573 = vmatpush2.msra.mxu0 0.0
      %574 = vmatprep.subr.mxu0 0.0
      %575 = vmatpush2.msra.mxu0 0.0
      %576 = vmatprep.subr.mxu0 0.0
      %577 = vmatpush2.msra.mxu0 0.0
      %578 = vmatprep.subr.mxu0 0.0
      %579 = vmatpush2.msra.mxu0 0.0
      %580 = vmatprep.subr.mxu0 0.0
      %581 = vmatpush2.msra.mxu0 0.0
      %582 = vmatprep.subr.mxu0 0.0
      %583 = vmatpush2.msra.mxu0 0.0
      %584 = vmatprep.subr.mxu0 0.0
      %585 = vmatpush2.msra.mxu0 0.0
      %586 = vmatprep.subr.mxu0 0.0
      %587 = vmatpush2.msra.mxu0 0.0
      %588 = vmatprep.subr.mxu0 0.0
      %589 = vmatpush2.msra.mxu0 0.0
      %590 = vmatprep.mubr.f32.mxu0 0.0
      %591 = vmatmul.mubr.f32.gmra.mxu0 %v510
      %v592 = vpop.f32.mrf.mxu0
      %v593 = vadd.f32 %v489, %v592
      %v594 = vpop.f32.mrf.mxu0
      %v595 = vadd.f32 %v489, %v594
      %596 = vmatprep.mubr.f32.mxu0 0.0
      %597 = vmatmul.mubr.f32.gmra.mxu0 %v513
      %v598 = vpop.f32.mrf.mxu0
      %v599 = vadd.f32 %v494, %v598
      %v600 = vpop.f32.mrf.mxu0
      %v601 = vadd.f32 %v494, %v600
      %602 = vmatprep.mubr.f32.mxu0 0.0
      %603 = vmatmul.mubr.f32.gmra.mxu0 %v516
      %v604 = vpop.f32.mrf.mxu0
      %v605 = vadd.f32 %v499, %v604
      %v606 = vpop.f32.mrf.mxu0
      %v607 = vadd.f32 %v499, %v606
      %608 = vmatprep.mubr.f32.mxu0 0.0
      %609 = vmatmul.mubr.f32.gmra.mxu0 %v519
      %v610 = vpop.f32.mrf.mxu0
      %v611 = vadd.f32 %v504, %v610
      %v612 = vpop.f32.mrf.mxu0
      %v613 = vadd.f32 %v504, %v612
      %614 = vdwg.mxu0
      %v615 = vmax.f32 %v593, 0.0
      %v616 = vmax.f32 %v595, 0.0
      %v617 = vmax.f32 %v599, 0.0
      %v618 = vmax.f32 %v601, 0.0
      %v619 = vmax.f32 %v605, 0.0
      %v620 = vmax.f32 %v607, 0.0
      %v621 = vmax.f32 %v611, 0.0
      %v622 = vmax.f32 %v613, 0.0
      %v623 = vld [vmem:[%s3] sm:$0x1f]
      %v624 = vld [vmem:[%s4] sm:$0x1f]
      %626 = vset.pattern.permute.xlu0 0
      %627 = vperm.xlu0 %626, %v624
      %v628 = vpop.permute.xlu0 %627
      %vm630 = vcmask 261120
      %v632 = vsel %vm630, %v623, 0
      %634 = vmatprep.subr.mxu0 0.0
      %635 = vmatpush1.msra.mxu0 0.0
      %636 = vmatprep.subr.mxu0 0.0
      %637 = vmatpush1.msra.mxu0 0.0
      %638 = vmatprep.subr.mxu0 0.0
      %639 = vmatpush1.msra.mxu0 0.0
      %640 = vmatprep.subr.mxu0 0.0
      %641 = vmatpush1.msra.mxu0 0.0
      %642 = vmatprep.subr.mxu0 0.0
      %643 = vmatpush1.msra.mxu0 0.0
      %644 = vmatprep.subr.mxu0 0.0
      %645 = vmatpush1.msra.mxu0 0.0
      %646 = vmatprep.subr.mxu0 0.0
      %647 = vmatpush1.msra.mxu0 0.0
      %648 = vmatprep.subr.mxu0 0.0
      %649 = vmatpush1.msra.mxu0 0.0
      %650 = vmatprep.subr.mxu0 0.0
      %651 = vmatpush1.msra.mxu0 0.0
      %652 = vmatprep.subr.mxu0 0.0
      %653 = vmatpush1.msra.mxu0 0.0
      %654 = vmatprep.subr.mxu0 0.0
      %655 = vmatpush1.msra.mxu0 0.0
      %656 = vmatprep.subr.mxu0 0.0
      %657 = vmatpush1.msra.mxu0 0.0
      %658 = vmatprep.subr.mxu0 %v622
      %659 = vmatpush1.msra.mxu0 %v621
      %660 = vmatprep.subr.mxu0 %v620
      %661 = vmatpush1.msra.mxu0 %v619
      %662 = vmatprep.subr.mxu0 %v618
      %663 = vmatpush1.msra.mxu0 %v617
      %664 = vmatprep.subr.mxu0 %v616
      %665 = vmatpush1.msra.mxu0 %v615
      %666 = vmatprep.subr.mxu0 0.0
      %667 = vmatpush2.msra.mxu0 0.0
      %668 = vmatprep.subr.mxu0 0.0
      %669 = vmatpush2.msra.mxu0 0.0
      %670 = vmatprep.subr.mxu0 0.0
      %671 = vmatpush2.msra.mxu0 0.0
      %672 = vmatprep.subr.mxu0 0.0
      %673 = vmatpush2.msra.mxu0 0.0
      %674 = vmatprep.subr.mxu0 0.0
      %675 = vmatpush2.msra.mxu0 0.0
      %676 = vmatprep.subr.mxu0 0.0
      %677 = vmatpush2.msra.mxu0 0.0
      %678 = vmatprep.subr.mxu0 0.0
      %679 = vmatpush2.msra.mxu0 0.0
      %680 = vmatprep.subr.mxu0 0.0
      %681 = vmatpush2.msra.mxu0 0.0
      %682 = vmatprep.subr.mxu0 0.0
      %683 = vmatpush2.msra.mxu0 0.0
      %684 = vmatprep.subr.mxu0 0.0
      %685 = vmatpush2.msra.mxu0 0.0
      %686 = vmatprep.subr.mxu0 0.0
      %687 = vmatpush2.msra.mxu0 0.0
      %688 = vmatprep.subr.mxu0 0.0
      %689 = vmatpush2.msra.mxu0 0.0
      %690 = vmatprep.subr.mxu0 0.0
      %691 = vmatpush2.msra.mxu0 0.0
      %692 = vmatprep.subr.mxu0 0.0
      %693 = vmatpush2.msra.mxu0 0.0
      %694 = vmatprep.subr.mxu0 0.0
      %695 = vmatpush2.msra.mxu0 0.0
      %696 = vmatprep.subr.mxu0 0.0
      %697 = vmatpush2.msra.mxu0 0.0
      %698 = vmatprep.mubr.f32.mxu0 0.0
      %699 = vmatmul.mubr.f32.gmra.mxu0 %v632
      %v700 = vpop.f32.mrf.mxu0
      %v701 = vadd.f32 %v628, %v700
      %v702 = vpop.f32.mrf.mxu0
      %v703 = vadd.f32 %v628, %v702
      %704 = vdwg.mxu0
      %v707 = vcombine.low %v701, %v703
      %v709 = vunpack.c.l.s4 1983009808
      %v710 = vunpack.c.0.s8 %v709
      %v711 = vlaneseq
      %v712 = vshrl.u32 %v711, 7
      %v713 = vsub.s32 %v710, %v712
      %v714 = vrot.slane %v707, %v713
      %716 = vst [vmem:[%s456] sm:$0xf] %v714
      %v717 = vcombine.high %v714, %v714
      %719 = vst [vmem:[%s466] sm:$0xf] %v717
      %v720 = vld [vmem:[%s437] sm:$0x3]
      %v721 = vld [vmem:[%s446] sm:$0x3]
      %v722 = vrot.slane %v701, 1
      %v723 = vrot.slane %v703, 1
      %v726 = vmax.f32 %v701, %v722
      %v727 = vmax.f32 %v703, %v723
      %v728 = vsub.f32 %v701, %v722
      %v729 = vsub.f32 %v703, %v723
      %v730 = vand.u32 2147483647, %v728
      %v731 = vand.u32 2147483647, %v729
      %v732 = vsub.f32 0.0, %v730
      %v733 = vsub.f32 0.0, %v731
      %v734 = vmul.f32 %v732, 1.442695
      %v735 = vpow.pop %v734
      %v736 = vmul.f32 %v733, 1.442695
      %v737 = vpow.pop %v736
      %v738 = vadd.f32 %v735, 1.0
      %v739 = vlog2.pop %v738
      %v740 = vmul.f32 %v739, 0.6931472
      %v741 = vmul.f32 -0.5, %v735
      %v742 = vadd.f32 %v741, 1.0
      %v743 = vmul.f32 %v742, %v735
      %v744 = vand.u32 2147483647, %v735
      %vm745 = vcmp.lt.f32.partialorder %v744, 0.0004427343
      %v746 = vsel %vm745, %v743, %v740
      %v747 = vadd.f32 %v737, 1.0
      %v748 = vlog2.pop %v747
      %v749 = vmul.f32 %v748, 0.6931472
      %v750 = vmul.f32 -0.5, %v737
      %v751 = vadd.f32 %v750, 1.0
      %v752 = vmul.f32 %v751, %v737
      %v753 = vand.u32 2147483647, %v737
      %vm754 = vcmp.lt.f32.partialorder %v753, 0.0004427343
      %v755 = vsel %vm754, %v752, %v749
      %v756 = vadd.f32 %v726, %v746
      %v757 = vadd.f32 %v727, %v755
      %vm758 = vcmp.eq.s32.totalorder %v720, 1
      %v760 = vunpack.c.l.s4 1966171168
      %v761 = vunpack.c.0.s8 %v760
      %v762 = vlaneseq
      %v763 = vshrl.u32 %v762, 7
      %v764 = vsub.s32 %v761, %v763
      %v765 = vrot.slane %v707, %v764
      %v766 = vcombine.high %v765, %v765
      %v768 = vunpack.c.l.s4 1966171168
      %v769 = vunpack.c.0.s8 %v768
      %v770 = vlaneseq
      %v771 = vshrl.u32 %v770, 7
      %v772 = vsub.s32 %v769, %v771
      %v773 = vrot.slane %v766, %v772
      %v776 = vunpack.c.l.s4 1966171168
      %v777 = vunpack.c.0.s8 %v776
      %v778 = vlaneseq
      %v779 = vshrl.u32 %v778, 7
      %v780 = vsub.s32 %v777, %v779
      %v781 = vrot.slane %v765, %v780
      %v783 = vsel %vm758, %v773, %v781
      %vm784 = vcmp.ne.s32.totalorder %v720, 255
      %vm785 = vcmp.ge.s32.totalorder %v720, 0
      %vm786 = vmand %vm784, %vm785
      %v787 = vsel %vm786, 1, 0
      %v788 = vcvt.s32.f32 %v787
      %v790 = vlaneseq
      %v791 = vshrl.u32 %v790, 7
      %v792 = vsub.s32 0, %v791
      %v793 = vrot.slane %v783, %v792
      %v794 = vlaneseq
      %v795 = vshrl.u32 %v794, 7
      %v796 = vsub.s32 1, %v795
      %v797 = vrot.slane %v783, %v796
      %v800 = vsub.f32 %v756, %v793
      %v801 = vsub.f32 %v757, %v797
      %v803 = vlaneseq
      %v804 = vshrl.u32 %v803, 7
      %v805 = vsub.s32 0, %v804
      %v806 = vrot.slane %v788, %v805
      %v807 = vlaneseq
      %v808 = vshrl.u32 %v807, 7
      %v809 = vsub.s32 1, %v808
      %v810 = vrot.slane %v788, %v809
      %v813 = vmul.f32 %v800, %v806
      %v814 = vmul.f32 %v801, %v810
      %vm815 = vcmask 1040384
      %v816 = vsel %vm815, %v813, 0.0
      %v817 = vsel %vm815, %v814, 0.0
      %v818 = vadd.f32 %v816, %v817
      %819 = vadd.xlane.f32.xlu0 %v818
      %v820 = vpop.xlane.xlu0 %819
      %v821 = vsel %vm815, %v806, 0.0
      %v822 = vsel %vm815, %v810, 0.0
      %v823 = vadd.f32 %v821, %v822
      %824 = vadd.xlane.f32.xlu0 %v823
      %v825 = vpop.xlane.xlu0 %824
      %v826 = vcombine.high %v773, %v773
      %v828 = vcombine.high %v781, %v781
      %v830 = vsel %vm758, %v826, %v828
      %v832 = vlaneseq
      %v833 = vshrl.u32 %v832, 7
      %v834 = vsub.s32 0, %v833
      %v835 = vrot.slane %v830, %v834
      %v836 = vlaneseq
      %v837 = vshrl.u32 %v836, 7
      %v838 = vsub.s32 1, %v837
      %v839 = vrot.slane %v830, %v838
      %v842 = vsub.f32 %v756, %v835
      %v843 = vsub.f32 %v757, %v839
      %v844 = vmul.f32 %v842, %v806
      %v845 = vmul.f32 %v843, %v810
      %vm846 = vcmask 1042434
      %v847 = vsel %vm846, %v844, 0.0
      %v848 = vsel %vm846, %v845, 0.0
      %v849 = vadd.f32 %v847, %v848
      %850 = vadd.xlane.f32.xlu0 %v849
      %v851 = vpop.xlane.xlu0 %850
      %v852 = vrot.slane %v701, 7
      %v853 = vrot.slane %v703, 7
      %vm856 = vcmp.gt.f32.partialorder %v701, %v852
      %vm857 = vcmp.gt.f32.partialorder %v703, %v853
      %v858 = vsel %vm856, 1, 0
      %v859 = vsel %vm857, 1, 0
      %v860 = vsel %vm785, 1, 0
      %v861 = vcvt.s32.f32 %v860
      %v862 = vlaneseq
      %v863 = vshrl.u32 %v862, 7
      %v864 = vsub.s32 0, %v863
      %v865 = vrot.slane %v720, %v864
      %v866 = vlaneseq
      %v867 = vshrl.u32 %v866, 7
      %v868 = vsub.s32 1, %v867
      %v869 = vrot.slane %v720, %v868
      %vm870 = vcmp.eq.s32.totalorder %v858, %v865
      %vm871 = vcmp.eq.s32.totalorder %v859, %v869
      %v872 = vsel %vm870, 1, 0
      %v873 = vsel %vm871, 1, 0
      %v874 = vcvt.s32.f32 %v872
      %v875 = vcvt.s32.f32 %v873
      %v878 = vcombine.low %v874, %v875
      %v880 = vunpack.c.l.s4 1966171168
      %v881 = vunpack.c.0.s8 %v880
      %v882 = vlaneseq
      %v883 = vshrl.u32 %v882, 7
      %v884 = vsub.s32 %v881, %v883
      %v885 = vrot.slane %v878, %v884
      %v886 = vcombine.high %v885, %v885
      %v888 = vunpack.c.l.s4 1966171168
      %v889 = vunpack.c.0.s8 %v888
      %v890 = vlaneseq
      %v891 = vshrl.u32 %v890, 7
      %v892 = vsub.s32 %v889, %v891
      %v893 = vrot.slane %v886, %v892
      %v895 = vmul.f32 %v861, %v893
      %v897 = vlaneseq
      %v898 = vshrl.u32 %v897, 7
      %v899 = vsub.s32 0, %v898
      %v900 = vrot.slane %v895, %v899
      %v901 = vlaneseq
      %v902 = vshrl.u32 %v901, 7
      %v903 = vsub.s32 1, %v902
      %v904 = vrot.slane %v895, %v903
      %v907 = vsel %vm815, %v900, 0.0
      %v908 = vsel %vm815, %v904, 0.0
      %v909 = vadd.f32 %v907, %v908
      %910 = vadd.xlane.f32.xlu0 %v909
      %v911 = vpop.xlane.xlu0 %910
      %v913 = vlaneseq
      %v914 = vshrl.u32 %v913, 7
      %v915 = vsub.s32 0, %v914
      %v916 = vrot.slane %v861, %v915
      %v917 = vlaneseq
      %v918 = vshrl.u32 %v917, 7
      %v919 = vsub.s32 1, %v918
      %v920 = vrot.slane %v861, %v919
      %v923 = vsel %vm815, %v916, 0.0
      %v924 = vsel %vm815, %v920, 0.0
      %v925 = vadd.f32 %v923, %v924
      %926 = vadd.xlane.f32.xlu0 %v925
      %v927 = vpop.xlane.xlu0 %926
      %v928 = vmax.f32 %v701, 0.0
      %v929 = vmax.f32 %v703, 0.0
      %v931 = vlaneseq
      %v932 = vshrl.u32 %v931, 7
      %v933 = vsub.s32 0, %v932
      %v934 = vrot.slane %v721, %v933
      %v935 = vlaneseq
      %v936 = vshrl.u32 %v935, 7
      %v937 = vsub.s32 1, %v936
      %v938 = vrot.slane %v721, %v937
      %v941 = vmul.f32 %v701, %v934
      %v942 = vmul.f32 %v703, %v938
      %v943 = vsub.f32 %v928, %v941
      %v944 = vsub.f32 %v929, %v942
      %v945 = vand.u32 2147483647, %v701
      %v946 = vand.u32 2147483647, %v703
      %v947 = vsub.f32 0.0, %v945
      %v948 = vsub.f32 0.0, %v946
      %v949 = vmul.f32 %v947, 1.442695
      %v950 = vpow.pop %v949
      %v951 = vmul.f32 %v948, 1.442695
      %v952 = vpow.pop %v951
      %v953 = vadd.f32 %v950, 1.0
      %v954 = vlog2.pop %v953
      %v955 = vmul.f32 %v954, 0.6931472
      %v956 = vmul.f32 -0.5, %v950
      %v957 = vadd.f32 %v956, 1.0
      %v958 = vmul.f32 %v957, %v950
      %v959 = vand.u32 2147483647, %v950
      %vm960 = vcmp.lt.f32.partialorder %v959, 0.0004427343
      %v961 = vsel %vm960, %v958, %v955
      %v962 = vadd.f32 %v952, 1.0
      %v963 = vlog2.pop %v962
      %v964 = vmul.f32 %v963, 0.6931472
      %v965 = vmul.f32 -0.5, %v952
      %v966 = vadd.f32 %v965, 1.0
      %v967 = vmul.f32 %v966, %v952
      %v968 = vand.u32 2147483647, %v952
      %vm969 = vcmp.lt.f32.partialorder %v968, 0.0004427343
      %v970 = vsel %vm969, %v967, %v964
      %v971 = vadd.f32 %v943, %v961
      %v972 = vadd.f32 %v944, %v970
      %vm973 = vcmask 1044484
      %v974 = vsel %vm973, %v971, 0.0
      %v975 = vsel %vm973, %v972, 0.0
      %v976 = vadd.f32 %v974, %v975
      %977 = vadd.xlane.f32.xlu0 %v976
      %v978 = vpop.xlane.xlu0 %977
      %vm979 = vcmp.gt.f32.partialorder %v701, 1.3862944
      %vm980 = vcmp.gt.f32.partialorder %v703, 1.3862944
      %v981 = vsel %vm979, %v865, 255
      %v982 = vsel %vm980, %v869, 255
      %vm983 = vcmp.eq.s32.totalorder %v981, 1
      %vm984 = vcmp.eq.s32.totalorder %v982, 1
      %v985 = vrot.slane %v701, 6
      %v986 = vrot.slane %v703, 6
      %v989 = vsel %vm983, %v852, %v985
      %v990 = vsel %vm984, %v853, %v986
      %vm991 = vcmp.ne.s32.totalorder %v981, 255
      %vm992 = vcmp.ne.s32.totalorder %v982, 255
      %vm993 = vcmp.ge.s32.totalorder %v981, 0
      %vm994 = vcmp.ge.s32.totalorder %v982, 0
      %vm995 = vmand %vm991, %vm993
      %vm996 = vmand %vm992, %vm994
      %v997 = vsel %vm995, 1, 0
      %v998 = vsel %vm996, 1, 0
      %v999 = vcvt.s32.f32 %v997
      %v1000 = vcvt.s32.f32 %v998
      %v1003 = vrot.slane %v989, 2
      %v1004 = vrot.slane %v990, 2
      %v1007 = vsub.f32 %v756, %v1003
      %v1008 = vsub.f32 %v757, %v1004
      %v1011 = vrot.slane %v999, 2
      %v1012 = vrot.slane %v1000, 2
      %v1015 = vmul.f32 %v1007, %v1011
      %v1016 = vmul.f32 %v1008, %v1012
      %v1017 = vsel %vm846, %v1015, 0.0
      %v1018 = vsel %vm846, %v1016, 0.0
      %v1019 = vadd.f32 %v1017, %v1018
      %1020 = vadd.xlane.f32.xlu0 %v1019
      %v1021 = vpop.xlane.xlu0 %1020
      %v1022 = vsel %vm973, %v999, 0.0
      %v1023 = vsel %vm973, %v1000, 0.0
      %v1024 = vadd.f32 %v1022, %v1023
      %1025 = vadd.xlane.f32.xlu0 %v1024
      %v1026 = vpop.xlane.xlu0 %1025
      %v1027 = vlaneseq
      %v1028 = vand.u32 %v1027, 127
      %vm1029 = vcmp.eq.s32.totalorder %v1028, 0
      %v1030 = vlaneseq
      %v1031 = vshrl.u32 %v1030, 7
      %v1032 = vsub.s32 0, %v1031
      %v1033 = vrot.slane %v820, %v1032
      %v1034 = vsel %vm1029, %v1033, 0.0
      %v1035 = vadd.f32 %v1034, 0.0
      %vm1036 = vcmp.eq.s32.totalorder %v1028, 1
      %v1037 = vlaneseq
      %v1038 = vshrl.u32 %v1037, 7
      %v1039 = vsub.s32 0, %v1038
      %v1040 = vrot.slane %v825, %v1039
      %v1041 = vsel %vm1036, %v1040, 0.0
      %v1042 = vadd.f32 %v1035, %v1041
      %vm1043 = vcmp.eq.s32.totalorder %v1028, 2
      %v1044 = vlaneseq
      %v1045 = vshrl.u32 %v1044, 7
      %v1046 = vsub.s32 2, %v1045
      %v1047 = vrot.slane %v851, %v1046
      %v1048 = vsel %vm1043, %v1047, 0.0
      %v1049 = vadd.f32 %v1042, %v1048
      %vm1050 = vcmp.eq.s32.totalorder %v1028, 3
      %v1051 = vsel %vm1050, %v1040, 0.0
      %v1052 = vadd.f32 %v1049, %v1051
      %vm1053 = vcmp.eq.s32.totalorder %v1028, 4
      %v1054 = vlaneseq
      %v1055 = vshrl.u32 %v1054, 7
      %v1056 = vsub.s32 0, %v1055
      %v1057 = vrot.slane %v911, %v1056
      %v1058 = vsel %vm1053, %v1057, 0.0
      %v1059 = vadd.f32 %v1052, %v1058
      %vm1060 = vcmp.eq.s32.totalorder %v1028, 5
      %v1061 = vlaneseq
      %v1062 = vshrl.u32 %v1061, 7
      %v1063 = vsub.s32 0, %v1062
      %v1064 = vrot.slane %v927, %v1063
      %v1065 = vsel %vm1060, %v1064, 0.0
      %v1066 = vadd.f32 %v1059, %v1065
      %vm1067 = vcmp.eq.s32.totalorder %v1028, 6
      %v1068 = vlaneseq
      %v1069 = vshrl.u32 %v1068, 7
      %v1070 = vsub.s32 4, %v1069
      %v1071 = vrot.slane %v978, %v1070
      %v1072 = vsel %vm1067, %v1071, 0.0
      %v1073 = vadd.f32 %v1066, %v1072
      %vm1074 = vcmp.eq.s32.totalorder %v1028, 7
      %v1075 = vlaneseq
      %v1076 = vshrl.u32 %v1075, 7
      %v1077 = vsub.s32 2, %v1076
      %v1078 = vrot.slane %v1021, %v1077
      %v1079 = vsel %vm1074, %v1078, 0.0
      %v1080 = vadd.f32 %v1073, %v1079
      %vm1081 = vcmp.eq.s32.totalorder %v1028, 8
      %v1082 = vlaneseq
      %v1083 = vshrl.u32 %v1082, 7
      %v1084 = vsub.s32 4, %v1083
      %v1085 = vrot.slane %v1026, %v1084
      %v1086 = vsel %vm1081, %v1085, 0.0
      %v1087 = vadd.f32 %v1080, %v1086
      %v1088 = vld [vmem:[%s471] sm:$0xff]
      %v1089 = vadd.f32 %v1088, %v1087
      %1090 = vst [vmem:[%s471] sm:$0xff] %v1089
      %s1091 = smul.u32 2, %s26
      %p1092 = scmp.lt.s32.totalorder %s25, 1
      %s1093 = scalar_select %p1092, %s25, 1
      %p1094 = scmp.lt.s32.totalorder %s1091, 1
      %s1095 = scalar_select %p1094, %s1091, 1
      %s1096 = smul.addr %s1093, 2
      %s1097 = sadd.s32 %s1095, %s1096
      %s1098 = smul.addr %s1097, 2
      %s1099 = scalar_lea.vmem %s7, %s1098
      %s1100 = smul.u32 2, %s26
      %p1101 = scmp.lt.s32.totalorder %s25, 1
      %s1102 = scalar_select %p1101, %s25, 1
      %p1103 = scmp.lt.s32.totalorder %s1100, 1
      %s1104 = scalar_select %p1103, %s1100, 1
      %s1105 = smul.addr %s1102, 2
      %s1106 = sadd.s32 %s1104, %s1105
      %s1107 = smul.addr %s1106, 2
      %s1108 = scalar_lea.vmem %s8, %s1107
      %p1109 = scmp.lt.s32.totalorder %s25, 1
      %s1110 = scalar_select %p1109, %s25, 1
      %s1111 = smul.addr %s1110, 8
      %s1112 = scalar_lea.vmem %s9, %s1111
      // Predicated region
      $region53: #{full_model_forward.1} parent=47 // pred_check
        %p1113 = pneg %p221
      $region54: #{full_model_forward.1} parent=47 // pred_check_branch
        %1115 = sbr.rel (%p1113) target = $region56
      $region55: #{full_model_forward.1} parent=47 // pred_region
        %s1116 = smul.u32 2, %s26
      $region56: #{full_model_forward.1} parent=47 // pred_fallthru
        _
      // Predicated region
      $region57: #{full_model_forward.1} parent=47 // pred_check
        %p1117 = pneg %p249
      $region58: #{full_model_forward.1} parent=47 // pred_check_branch
        %1119 = sbr.rel (%p1117) target = $region60
      $region59: #{full_model_forward.1} parent=47 // pred_region
        %s1120 = smul.u32 2, %s26
      $region60: #{full_model_forward.1} parent=47 // pred_fallthru
        _
      // Predicated region
      $region61: #{full_model_forward.1} parent=47 // pred_check
        %p1121 = pneg %p275
      $region62: #{full_model_forward.1} parent=47 // pred_check_branch
        %1123 = sbr.rel (%p1121) target = $region64
      $region63: #{full_model_forward.1} parent=47 // pred_region
        _
      $region64: #{full_model_forward.1} parent=47 // pred_fallthru
        _
    $region48: #{full_model_forward.1} parent=5 // pred_fallthru
      _
    %p1124 = scmp.le.s32.totalorder 2, %s16
    // Predicated region
    $region65: #{full_model_forward.1} parent=5 // pred_check
      %p1125 = pneg %p1124
    $region66: #{full_model_forward.1} parent=5 // pred_check_branch
      %1127 = sbr.rel (%p1125) target = $region68
    $region67: #{full_model_forward.1} parent=5 // pred_region
      %s1128 = ssub.s32 %s16, 2
      // Predicated region
      $region69: #{full_model_forward.1} parent=67 // pred_check
        %p1129 = pneg %p227
      $region70: #{full_model_forward.1} parent=67 // pred_check_branch
        %1131 = sbr.rel (%p1129) target = $region72
      $region71: #{full_model_forward.1} parent=67 // pred_region
        %s1132 = smul.u32 2, %s28
        %p1133 = scmp.lt.s32.totalorder %s27, 1
        %s1134 = scalar_select %p1133, %s27, 1
        %p1135 = scmp.lt.s32.totalorder %s1132, 1
        %s1136 = scalar_select %p1135, %s1132, 1
        %s1137 = smul.addr %s1134, 2
        %s1138 = sadd.s32 %s1136, %s1137
        %s1139 = smul.addr %s1138, 2
        %s1140 = scalar_lea.vmem %s7, %s1139
      $region72: #{full_model_forward.1} parent=67 // pred_fallthru
        _
      // Predicated region
      $region73: #{full_model_forward.1} parent=67 // pred_check
        %p1141 = pneg %p255
      $region74: #{full_model_forward.1} parent=67 // pred_check_branch
        %1143 = sbr.rel (%p1141) target = $region76
      $region75: #{full_model_forward.1} parent=67 // pred_region
        %s1144 = smul.u32 2, %s28
        %p1145 = scmp.lt.s32.totalorder %s27, 1
        %s1146 = scalar_select %p1145, %s27, 1
        %p1147 = scmp.lt.s32.totalorder %s1144, 1
        %s1148 = scalar_select %p1147, %s1144, 1
        %s1149 = smul.addr %s1146, 2
        %s1150 = sadd.s32 %s1148, %s1149
        %s1151 = smul.addr %s1150, 2
        %s1152 = scalar_lea.vmem %s8, %s1151
      $region76: #{full_model_forward.1} parent=67 // pred_fallthru
        _
      // Predicated region
      $region77: #{full_model_forward.1} parent=67 // pred_check
        %p1153 = pneg %p281
      $region78: #{full_model_forward.1} parent=67 // pred_check_branch
        %1155 = sbr.rel (%p1153) target = $region80
      $region79: #{full_model_forward.1} parent=67 // pred_region
        %p1156 = scmp.lt.s32.totalorder %s27, 1
        %s1157 = scalar_select %p1156, %s27, 1
        %s1158 = smul.addr %s1157, 8
        %s1159 = scalar_lea.vmem %s9, %s1158
      $region80: #{full_model_forward.1} parent=67 // pred_fallthru
        _
    $region68: #{full_model_forward.1} parent=5 // pred_fallthru
      _
  $region6: #{full_model_forward.1} parent=0 // loop_footer
    %s20 = sadd.s32 1, %s16
  $region7: #{full_model_forward.1} parent=0 // loop_footer_branch
    %15 = sbr.rel target = $region3
  $region8: #{full_model_forward.1} parent=0 // loop_exit
    _

</llo_original>
